<compile_context>
chip_gen: v7x
topology: tpu7x:2x2x1
jax: 0.10.0
libtpu: 0.0.40
codegen_flags: <defaults>
</compile_context>

<pallas_src>
import numpy as np
import jax
import jax.numpy as jnp
from jax.experimental import pallas as pl
from jax.experimental.pallas import tpu as pltpu

N_QUBITS = 4
N_LAYERS = 1            # module hardcodes n_layers = 1
KERNEL_SIZE = 2
DIM = 2 ** N_QUBITS     # 16 statevector amplitudes
LANE = 128              # TPU lane width
MAX_TILE = 512          # lane-axis tile cap (vreg-pressure friendly)


# ----------------------------- Pallas kernel --------------------------------
def quanv_kernel(x_ref, u_ref, zt2_ref, bits_ref, o_ref):
    # x_ref   : (4, NT)   per-patch RY input angles, patch index on lane axis
    # u_ref   : (32, 16)  stacked weight unitary [Ur; Ui], U[j, k]
    # zt2_ref : (4, 32)   PauliZ signs duplicated for [Re; Im] rows
    # bits_ref: (16, 4)   bit table bits[k, q] = bit_q(k)
    # o_ref   : (4, NT)   expectation values <Z_q> per patch
    theta = x_ref[...]
    phi = theta * jnp.float32(0.5) + jnp.float32(np.pi / 4.0)  # RY(theta) H |0>
    c = jnp.cos(phi)                                           # (4, NT) |0> amp
    s = jnp.sin(phi)                                           # (4, NT) |1> amp
    d = s - c

    bits = bits_ref[...]                                       # (16, 4)

    # psi0[k, n] = prod_q ( s[q,n] if bit_q(k)==1 else c[q,n] )
    #            = prod_q ( c[q,n] + bit_q(k) * (s - c)[q,n] )
    psi0 = c[0:1, :] + bits[:, 0:1] * d[0:1, :]                # (16, NT)
    for q in range(1, N_QUBITS):
        psi0 = psi0 * (c[q:q + 1, :] + bits[:, q:q + 1] * d[q:q + 1, :])

    # amp = [Ur; Ui] @ psi0 on the MXU (f32, full precision).
    amp = jnp.dot(u_ref[...], psi0,
                  preferred_element_type=jnp.float32,
                  precision=jax.lax.Precision.HIGHEST)         # (32, NT)

    # <Z_q> = sum_k zt[q,k] * (ar[k]^2 + ai[k]^2) = zt2 @ (amp*amp) on the MXU.
    out = jnp.dot(zt2_ref[...], amp * amp,
                  preferred_element_type=jnp.float32,
                  precision=jax.lax.Precision.HIGHEST)         # (4, NT)
    o_ref[...] = out


# ------------------------- host-side (glue) setup ----------------------------
def build_weight_constants(weights):
    """Weight-only part of the circuit: U = (kron of RY(w[4+q])) @ diag(CRZ phases).
    Valid only for n_layers == 1 (as in the module). Returns stacked [Ur; Ui],
    the duplicated PauliZ sign table (4,32) and the qubit bit table (16,4)."""
    w = np.asarray(weights, dtype=np.float64).reshape(-1)
    assert w.size == 2 * N_QUBITS, "analytic constants are valid only for n_layers == 1"
    ks = np.arange(DIM)
    bits = np.stack([(ks >> (N_QUBITS - 1 - q)) & 1 for q in range(N_QUBITS)],
                    axis=1).astype(np.float64)                 # (16, 4)

    # CRZ(w[i]) on [i, (i+1)%4] is diagonal: phase exp(+/- i w/2) when control bit = 1.
    angle = np.zeros(DIM)
    for i in range(N_QUBITS):
        angle += bits[:, i] * (2.0 * bits[:, (i + 1) % N_QUBITS] - 1.0) * (w[i] / 2.0)

    # Final RY layer as a kron product (wire 0 most significant, PennyLane ordering).
    R = np.array([[1.0]])
    for q in range(N_QUBITS):
        t = w[N_QUBITS + q]
        ct, st = np.cos(t / 2.0), np.sin(t / 2.0)
        R = np.kron(R, np.array([[ct, -st], [st, ct]]))

    Ur = R * np.cos(angle)[None, :]
    Ui = R * np.sin(angle)[None, :]
    u_stack = np.concatenate([Ur, Ui], axis=0)                 # (32, 16)
    zt = 1.0 - 2.0 * bits.T                                    # (4, 16)
    zt2 = np.concatenate([zt, zt], axis=1)                     # (4, 32) for [Re; Im]
    return u_stack, zt2, bits


def _choose_tiling(n):
    """Lane-axis tile: <= MAX_TILE, and aim for >=2 grid steps when n > LANE
    (so v7x megacore can split the 'parallel' axis and DMA pipelines)."""
    half = -(-n // 2)                                   # ceil(n / 2)
    n_tile = min(MAX_TILE, max(LANE, ((half + LANE - 1) // LANE) * LANE))
    n_pad = ((n + n_tile - 1) // n_tile) * n_tile
    return n_tile, n_pad


def quanv2d_forward(x, weights):
    bs, cch, H, W = x.shape
    assert cch * KERNEL_SIZE * KERNEL_SIZE == N_QUBITS, "need 4 inputs per patch"
    oh, ow = H // 2, W // 2

    # Extract 2x2 stride-2 patches -> (bs*oh*ow, 4) (torch.flatten order), then
    # transpose so the patch index lands on the 128-lane axis: (4, N).
    xs = (x[:, 0]
          .reshape(bs, oh, 2, ow, 2)
          .transpose(0, 1, 3, 2, 4)
          .reshape(bs * oh * ow, N_QUBITS)
          .astype(jnp.float32)
          .T)                                                  # (4, N)
    n = xs.shape[1]

    n_tile, n_pad = _choose_tiling(n)
    xs = jnp.pad(xs, ((0, 0), (0, n_pad - n)))

    u_stack, zt2, bits = build_weight_constants(weights)
    u_j = jnp.asarray(u_stack, dtype=jnp.float32)
    zt2_j = jnp.asarray(zt2, dtype=jnp.float32)
    bits_j = jnp.asarray(bits, dtype=jnp.float32)

    out = pl.pallas_call(
        quanv_kernel,
        out_shape=jax.ShapeDtypeStruct((N_QUBITS, n_pad), jnp.float32),
        grid=(n_pad // n_tile,),
        in_specs=[
            pl.BlockSpec((N_QUBITS, n_tile), lambda i: (0, i)),
            pl.BlockSpec((2 * DIM, DIM), lambda i: (0, 0)),
            pl.BlockSpec((N_QUBITS, 2 * DIM), lambda i: (0, 0)),
            pl.BlockSpec((DIM, N_QUBITS), lambda i: (0, 0)),
        ],
        out_specs=pl.BlockSpec((N_QUBITS, n_tile), lambda i: (0, i)),
        compiler_params=pltpu.CompilerParams(
            dimension_semantics=("parallel",)),
    )(xs, u_j, zt2_j, bits_j)

    # torch.cat([...], dim=1).view(bs, 4, 7, 7): flat index per batch = p*4 + q.
    return out[:, :n].T.reshape(bs, N_QUBITS, oh, ow)


# --------------------------- numpy reference ---------------------------------
def _ry(t):
    ct, st = np.cos(t / 2.0), np.sin(t / 2.0)
    return np.array([[ct, -st], [st, ct]], dtype=np.complex128)


def _apply1(state, g, wire):
    st = np.tensordot(g, state, axes=[[1], [wire]])
    return np.moveaxis(st, 0, wire)


def _circuit_ref(theta, w):
    Hg = np.array([[1, 1], [1, -1]], dtype=np.complex128) / np.sqrt(2.0)
    state = np.zeros(DIM, dtype=np.complex128)
    state[0] = 1.0
    state = state.reshape((2,) * N_QUBITS)
    for q in range(N_QUBITS):
        state = _apply1(state, Hg, q)
        state = _apply1(state, _ry(theta[q]), q)
    ks = np.arange(DIM)
    flat = state.reshape(DIM)
    for i in range(N_QUBITS):
        ci = (ks >> (N_QUBITS - 1 - i)) & 1
        ti = (ks >> (N_QUBITS - 1 - ((i + 1) % N_QUBITS))) & 1
        flat = flat * np.exp(1j * ci * (2 * ti - 1) * w[i] / 2.0)
    state = flat.reshape((2,) * N_QUBITS)
    for q in range(N_QUBITS):
        state = _apply1(state, _ry(w[N_QUBITS + q]), q)
    prob = np.abs(state.reshape(DIM)) ** 2
    return np.array([np.sum(prob * (1.0 - 2.0 * ((ks >> (N_QUBITS - 1 - q)) & 1)))
                     for q in range(N_QUBITS)])


def reference_forward(x, weights):
    bs, _, H, W = x.shape
    w = np.asarray(weights, dtype=np.float64).reshape(-1)
    outs = []
    for i in range(0, H - 1, 2):
        for j in range(0, W - 1, 2):
            patch = x[:, :, i:i + KERNEL_SIZE, j:j + KERNEL_SIZE].reshape(bs, -1)
            outs.append(np.stack([_circuit_ref(patch[b], w) for b in range(bs)], axis=0))
    flat = np.concatenate(outs, axis=1)            # (bs, 49*4), like torch.cat(dim=1)
    return flat.reshape(bs, N_QUBITS, H // 2, W // 2)


# ------------------------------- main -----------------------------------------
if __name__ == "__main__":
    key = jax.random.PRNGKey(0)
    kx, kw = jax.random.split(key)

    bs, C, H, W = 2, 1, 14, 14   # module's view(bs, 4, 7, 7) implies 1x14x14 inputs
    x = jax.random.uniform(kx, (bs, C, H, W), dtype=jnp.float32,
                           minval=0.0, maxval=float(np.pi))
    # TorchLayer-style deterministic weight init: uniform(0, 2*pi), shape (n_layers, 2*n_qubits)
    weights = jax.random.uniform(kw, (N_LAYERS, 2 * N_QUBITS), dtype=jnp.float32,
                                 minval=0.0, maxval=2.0 * float(np.pi))

    out = quanv2d_forward(x, weights)
    out = jax.block_until_ready(out)
    assert out.shape == (bs, 4, 7, 7)

    ref = reference_forward(np.asarray(x, dtype=np.float64), np.asarray(weights))
    np.testing.assert_allclose(np.asarray(out), ref, rtol=1e-4, atol=1e-4)

    print("KERNEL_OK")
</pallas_src>

<mosaic_0001>
module attributes {stable_mosaic.version = 11 : i64} {
  func.func @quanv_kernel(%arg0: i32, %arg1: memref<4x128xf32, #tpu.memory_space<vmem>>, %arg2: memref<32x16xf32, #tpu.memory_space<vmem>>, %arg3: memref<4x32xf32, #tpu.memory_space<vmem>>, %arg4: memref<16x4xf32, #tpu.memory_space<vmem>>, %arg5: memref<4x128xf32, #tpu.memory_space<vmem>>) attributes {dimension_semantics = [#tpu.dimension_semantics<parallel>], iteration_bounds = array<i64: 1>, scalar_prefetch = 0 : i64, scratch_operands = 0 : i64, tpu.core_type = #tpu.core_type<tc>, window_params = [{transform_indices = @transform_0, window_bounds = array<i64: 4, 128>}, {pipeline_mode = #tpu.pipeline_mode<synchronous>, transform_indices = @transform_1, window_bounds = array<i64: 32, 16>}, {pipeline_mode = #tpu.pipeline_mode<synchronous>, transform_indices = @transform_2, window_bounds = array<i64: 4, 32>}, {pipeline_mode = #tpu.pipeline_mode<synchronous>, transform_indices = @transform_3, window_bounds = array<i64: 16, 4>}, {transform_indices = @transform_4, window_bounds = array<i64: 4, 128>}]} {
    %c0 = arith.constant 0 : index
    %c0_0 = arith.constant 0 : index
    %0 = vector.load %arg1[%c0, %c0_0] : memref<4x128xf32, #tpu.memory_space<vmem>>, vector<4x128xf32>
    %cst = arith.constant 5.000000e-01 : f32
    %1 = vector.broadcast %cst : f32 to vector<4x128xf32>
    %2 = arith.mulf %0, %1 : vector<4x128xf32>
    %cst_1 = arith.constant 0.785398185 : f32
    %3 = vector.broadcast %cst_1 : f32 to vector<4x128xf32>
    %4 = arith.addf %2, %3 : vector<4x128xf32>
    %5 = math.cos %4 : vector<4x128xf32>
    %6 = math.sin %4 : vector<4x128xf32>
    %7 = arith.subf %6, %5 : vector<4x128xf32>
    %c0_2 = arith.constant 0 : index
    %c0_3 = arith.constant 0 : index
    %8 = vector.load %arg4[%c0_2, %c0_3] : memref<16x4xf32, #tpu.memory_space<vmem>>, vector<16x4xf32>
    %9 = vector.extract_strided_slice %5 {offsets = [0, 0], sizes = [1, 128], strides = [1, 1]} : vector<4x128xf32> to vector<1x128xf32>
    %10 = vector.extract_strided_slice %8 {offsets = [0, 0], sizes = [16, 1], strides = [1, 1]} : vector<16x4xf32> to vector<16x1xf32>
    %11 = vector.extract_strided_slice %7 {offsets = [0, 0], sizes = [1, 128], strides = [1, 1]} : vector<4x128xf32> to vector<1x128xf32>
    %12 = vector.broadcast %10 : vector<16x1xf32> to vector<16x128xf32>
    %13 = vector.broadcast %11 : vector<1x128xf32> to vector<16x128xf32>
    %14 = arith.mulf %12, %13 : vector<16x128xf32>
    %15 = vector.broadcast %9 : vector<1x128xf32> to vector<16x128xf32>
    %16 = arith.addf %15, %14 : vector<16x128xf32>
    %17 = vector.extract_strided_slice %5 {offsets = [1, 0], sizes = [1, 128], strides = [1, 1]} : vector<4x128xf32> to vector<1x128xf32>
    %18 = vector.extract_strided_slice %8 {offsets = [0, 1], sizes = [16, 1], strides = [1, 1]} : vector<16x4xf32> to vector<16x1xf32>
    %19 = vector.extract_strided_slice %7 {offsets = [1, 0], sizes = [1, 128], strides = [1, 1]} : vector<4x128xf32> to vector<1x128xf32>
    %20 = vector.broadcast %18 : vector<16x1xf32> to vector<16x128xf32>
    %21 = vector.broadcast %19 : vector<1x128xf32> to vector<16x128xf32>
    %22 = arith.mulf %20, %21 : vector<16x128xf32>
    %23 = vector.broadcast %17 : vector<1x128xf32> to vector<16x128xf32>
    %24 = arith.addf %23, %22 : vector<16x128xf32>
    %25 = arith.mulf %16, %24 : vector<16x128xf32>
    %26 = vector.extract_strided_slice %5 {offsets = [2, 0], sizes = [1, 128], strides = [1, 1]} : vector<4x128xf32> to vector<1x128xf32>
    %27 = vector.extract_strided_slice %8 {offsets = [0, 2], sizes = [16, 1], strides = [1, 1]} : vector<16x4xf32> to vector<16x1xf32>
    %28 = vector.extract_strided_slice %7 {offsets = [2, 0], sizes = [1, 128], strides = [1, 1]} : vector<4x128xf32> to vector<1x128xf32>
    %29 = vector.broadcast %27 : vector<16x1xf32> to vector<16x128xf32>
    %30 = vector.broadcast %28 : vector<1x128xf32> to vector<16x128xf32>
    %31 = arith.mulf %29, %30 : vector<16x128xf32>
    %32 = vector.broadcast %26 : vector<1x128xf32> to vector<16x128xf32>
    %33 = arith.addf %32, %31 : vector<16x128xf32>
    %34 = arith.mulf %25, %33 : vector<16x128xf32>
    %35 = vector.extract_strided_slice %5 {offsets = [3, 0], sizes = [1, 128], strides = [1, 1]} : vector<4x128xf32> to vector<1x128xf32>
    %36 = vector.extract_strided_slice %8 {offsets = [0, 3], sizes = [16, 1], strides = [1, 1]} : vector<16x4xf32> to vector<16x1xf32>
    %37 = vector.extract_strided_slice %7 {offsets = [3, 0], sizes = [1, 128], strides = [1, 1]} : vector<4x128xf32> to vector<1x128xf32>
    %38 = vector.broadcast %36 : vector<16x1xf32> to vector<16x128xf32>
    %39 = vector.broadcast %37 : vector<1x128xf32> to vector<16x128xf32>
    %40 = arith.mulf %38, %39 : vector<16x128xf32>
    %41 = vector.broadcast %35 : vector<1x128xf32> to vector<16x128xf32>
    %42 = arith.addf %41, %40 : vector<16x128xf32>
    %43 = arith.mulf %34, %42 : vector<16x128xf32>
    %c0_4 = arith.constant 0 : index
    %c0_5 = arith.constant 0 : index
    %44 = vector.load %arg2[%c0_4, %c0_5] : memref<32x16xf32, #tpu.memory_space<vmem>>, vector<32x16xf32>
    %cst_6 = arith.constant dense<0.000000e+00> : vector<32x128xf32>
    %45 = tpu.matmul %44, %43, %cst_6 {dimension_numbers = #tpu.dot_dimension_numbers<[1], [0], [0], [1], [0, 0, 1, 1], [], []>, precision = #tpu.contract_precision<fp32>} : vector<32x16xf32>, vector<16x128xf32>, vector<32x128xf32> -> vector<32x128xf32>
    %c0_7 = arith.constant 0 : index
    %c0_8 = arith.constant 0 : index
    %46 = vector.load %arg3[%c0_7, %c0_8] : memref<4x32xf32, #tpu.memory_space<vmem>>, vector<4x32xf32>
    %47 = arith.mulf %45, %45 : vector<32x128xf32>
    %cst_9 = arith.constant dense<0.000000e+00> : vector<4x128xf32>
    %48 = tpu.matmul %46, %47, %cst_9 {dimension_numbers = #tpu.dot_dimension_numbers<[1], [0], [0], [1], [0, 0, 1, 1], [], []>, precision = #tpu.contract_precision<fp32>} : vector<4x32xf32>, vector<32x128xf32>, vector<4x128xf32> -> vector<4x128xf32>
    %c0_10 = arith.constant 0 : index
    %c0_11 = arith.constant 0 : index
    %49 = vector.load %arg5[%c0_10, %c0_11] : memref<4x128xf32, #tpu.memory_space<vmem>>, vector<4x128xf32>
    tpu.vector_store %arg5[%c0_10, %c0_11], %48 {strides = array<i32>} : memref<4x128xf32, #tpu.memory_space<vmem>>, vector<4x128xf32>,
    return
  }
  func.func @transform_0(%arg0: i32) -> (i32, i32) {
    %c0_i32 = arith.constant 0 : i32
    %c0_i32_0 = arith.constant 0 : i32
    return %c0_i32, %arg0 : i32, i32
  }
  func.func @transform_1(%arg0: i32) -> (i32, i32) {
    %c0_i32 = arith.constant 0 : i32
    %c0_i32_0 = arith.constant 0 : i32
    %c0_i32_1 = arith.constant 0 : i32
    return %c0_i32, %c0_i32_0 : i32, i32
  }
  func.func @transform_2(%arg0: i32) -> (i32, i32) {
    %c0_i32 = arith.constant 0 : i32
    %c0_i32_0 = arith.constant 0 : i32
    %c0_i32_1 = arith.constant 0 : i32
    return %c0_i32, %c0_i32_0 : i32, i32
  }
  func.func @transform_3(%arg0: i32) -> (i32, i32) {
    %c0_i32 = arith.constant 0 : i32
    %c0_i32_0 = arith.constant 0 : i32
    %c0_i32_1 = arith.constant 0 : i32
    return %c0_i32, %c0_i32_0 : i32, i32
  }
  func.func @transform_4(%arg0: i32) -> (i32, i32) {
    %c0_i32 = arith.constant 0 : i32
    %c0_i32_0 = arith.constant 0 : i32
    return %c0_i32, %arg0 : i32, i32
  }
}

</mosaic_0001>

<llo_original>
// kernel: tpu_custom_call.1
$region0: #{tpu_custom_call.1}
  #allocation0 [shape = 'u32[]', space=smem, size = 0x4, offset = 0x4, fixed_abs, tag = 'smem constant byte address 0x4 - core index']
  #allocation1 [shape = 'u32[144,128]{1,0:T(1,128)}', space=vmem, size = 0x12000, scoped, tag = 'internal scratch']
  %s0 = inlined_call_operand.vmem [shape: f32[4,128], index: 0, kind: input, shape index: {}]
  %s1 = inlined_call_operand.vmem [shape: f32[32,16], index: 1, kind: input, shape index: {}]
  %s2 = inlined_call_operand.vmem [shape: f32[4,32], index: 2, kind: input, shape index: {}]
  %s3 = inlined_call_operand.vmem [shape: f32[16,4], index: 3, kind: input, shape index: {}]
  %s4 = inlined_call_operand.hbm [shape: f32[4,128], index: 4, kind: output, shape index: {}]
  %s5 = sld [smem:[#allocation0]]
  $region26: #{tpu_custom_call.1} parent=0
    _
  %s7 = ssub.s32 1, %s5
  %s8 = scalar_select 0, %s7, %s5
  $region1: #{tpu_custom_call.1} parent=0
    #allocation2 [shape = 'u8[2048]{0}', space=vmem, size = 0x800, scoped, tag = 'output window, operand 0, single buffered']
    #allocation3 [shape = 's32[1]{0}', space=sflag, size = 0x4, scoped, tag = 'scoped memory for tpu_custom_call.1']
    %9 = vsyncpa [#allocation3], 0
    // Predicated region
    $region2: #{tpu_custom_call.1} parent=1 // pred_check
      _
    $region3: #{tpu_custom_call.1} parent=1 // pred_check_branch
      %11 = sbr.rel (0) target = $region5
    $region4: #{tpu_custom_call.1} parent=1 // pred_region
      _
    $region5: #{tpu_custom_call.1} parent=1 // pred_fallthru
      _
    // Predicated region
    $region6: #{tpu_custom_call.1} parent=1 // pred_check
      _
    $region7: #{tpu_custom_call.1} parent=1 // pred_check_branch
      %13 = sbr.rel (0) target = $region9
    $region8: #{tpu_custom_call.1} parent=1 // pred_region
      _
    $region9: #{tpu_custom_call.1} parent=1 // pred_fallthru
      _
    // Predicated region
    $region10: #{tpu_custom_call.1} parent=1 // pred_check
      _
    $region11: #{tpu_custom_call.1} parent=1 // pred_check_branch
      %15 = sbr.rel (0) target = $region13
    $region12: #{tpu_custom_call.1} parent=1 // pred_region
      _
    $region13: #{tpu_custom_call.1} parent=1 // pred_fallthru
      _
    // Predicated region
    $region14: #{tpu_custom_call.1} parent=1 // pred_check
      _
    $region15: #{tpu_custom_call.1} parent=1 // pred_check_branch
      %17 = sbr.rel (0) target = $region17
    $region16: #{tpu_custom_call.1} parent=1 // pred_region
      _
    $region17: #{tpu_custom_call.1} parent=1 // pred_fallthru
      _
    %v18 = vld [vmem:[%s0] sm:$0xf]
    %v19 = vmul.f32 %v18, 0.5
    %v20 = vadd.f32 %v19, 0.7853982
    %v21 = vand.u32 2147483647, %v20
    %vm22 = vcmp.le.f32.partialorder %v21, 0.7853982
    %vm23 = vcmp.lt.s32.totalorder %v20, 0
    %v24 = vand.u32 %v20, 2139095040
    %v25 = vshrl.u32 %v24, 23
    %v26 = vsub.s32 %v25, 127
    %v27 = vand.u32 2147483647, %v20
    %v28 = vand.u32 %v27, 8388607
    %v29 = vor.u32 %v28, 8388608
    %v30 = vsub.s32 0, %v29
    %v31 = vadd.s32 %v26, 1
    %vm32 = vcmp.gt.s32.totalorder %v31, 0
    %v33 = vsel %vm32, %v31, 0
    %v34 = vshrl.u32 %v33, 5
    %v35 = vand.u32 %v33, 31
    %v36 = vsub.s32 32, %v35
    %v37 = vshrl.u32 683565275, %v36
    %v38 = vshll.u32 683565275, %v35
    %v39 = vshrl.u32 2475754826, %v36
    %v40 = vor.u32 %v38, %v39
    %v41 = vshll.u32 2475754826, %v35
    %v42 = vshrl.u32 2131351028, %v36
    %v43 = vor.u32 %v41, %v42
    %v44 = vshll.u32 2131351028, %v35
    %v45 = vshrl.u32 2102212464, %v36
    %v46 = vor.u32 %v44, %v45
    %v47 = vshll.u32 2102212464, %v35
    %v48 = vshrl.u32 920167782, %v36
    %v49 = vor.u32 %v47, %v48
    %v50 = vshll.u32 920167782, %v35
    %v51 = vshrl.u32 1326507024, %v36
    %v52 = vor.u32 %v50, %v51
    %vm53 = vcmp.lt.s32.totalorder %v34, 1
    %vm54 = vcmp.lt.s32.totalorder %v34, 2
    %vm55 = vcmp.lt.s32.totalorder %v34, 3
    %vm56 = vcmp.lt.s32.totalorder %v34, 4
    %v57 = vsel %vm53, %v37, %v40
    %v58 = vsel %vm56, %v46, 2102212464
    %v59 = vsel %vm55, %v43, %v58
    %v60 = vsel %vm54, %v57, %v59
    %v61 = vsel %vm53, %v40, %v43
    %v62 = vsel %vm56, %v49, 920167782
    %v63 = vsel %vm55, %v46, %v62
    %v64 = vsel %vm54, %v61, %v63
    %v65 = vsel %vm53, %v43, %v46
    %v66 = vsel %vm56, %v52, 1326507024
    %v67 = vsel %vm55, %v49, %v66
    %v68 = vsel %vm54, %v65, %v67
    %v69 = vshll.u32 %v29, 8
    %v70 = vmul.u32.u64.compose %v69, %v68
    %v71 = vextract.low.u32 %v70
    %v72 = vextract.high.u32 %v70
    %v73 = vmul.u32.u64.compose %v69, %v64
    %v74 = vextract.low.u32 %v73
    %v75 = vextract.high.u32 %v73
    %v76 = vmul.u32 %v69, %v60
    %v77 = vadd.s32 %v72, %v74
    %vm78 = vc.u32 %v72, %v74
    %v79 = vadd.s32 %v75, 1
    %v80 = vsel %vm78, %v79, %v75
    %v81 = vadd.s32 %v76, %v80
    %v82 = vadd.s32 %v81, 536870912
    %v83 = vshrl.u32 %v82, 30
    %v84 = vshll.u32 %v83, 30
    %v85 = vsub.s32 %v81, %v84
    %vm86 = vcmp.lt.s32.totalorder %v85, 0
    %v87 = vsub.s32 0, %v85
    %v88 = vsel %vm86, %v87, %v85
    %v89 = vclz %v88
    %v90 = vsub.s32 %v89, 2
    %vm91 = vcmp.gt.s32.totalorder 0, %v90
    %v92 = vsel %vm91, 0, %v90
    %v93 = vsub.s32 32, %v92
    %v94 = vshll.u32 %v85, %v92
    %v95 = vshrl.u32 %v77, %v93
    %v96 = vor.u32 %v94, %v95
    %v97 = vsub.s32 4294967266, %v92
    %v98 = vadd.s32 %v97, 127
    %v99 = vshll.u32 %v98, 23
    %v100 = vor.u32 4788187, %v99
    %v101 = vand.u32 2147483647, %v100
    %v103 = vcvt.s32.f32 %v96
    %v104 = vmul.f32 %v103, %v101
    %v105 = vxor.u32 %v104, 2147483648
    %v106 = vsel %vm23, %v105, %v104
    %v107 = vsub.s32 4, %v83
    %v108 = vsel %vm23, %v107, %v83
    %v109 = vsel %vm22, %v20, %v106
    %v110 = vsel %vm22, 0, %v108
    %v111 = vcosq.f32.pop %v109
    %v112 = vsinq.f32.pop %v109
    %vm113 = vweird.f32 %v20
    %v114 = vand.u32 %v110, 3
    %vm115 = vcmp.lt.s32.totalorder %v114, 2
    %vm116 = vcmp.eq.s32.totalorder %v114, 0
    %v117 = vxor.u32 %v112, 2147483648
    %v118 = vsel %vm116, %v111, %v117
    %vm119 = vcmp.eq.s32.totalorder %v114, 2
    %v120 = vxor.u32 %v111, 2147483648
    %v121 = vsel %vm119, %v120, %v112
    %v122 = vsel %vm115, %v118, %v121
    %v123 = vsel %vm113, nan, %v122
    %v124 = vand.u32 2147483647, %v20
    %vm125 = vcmp.le.f32.partialorder %v124, 0.7853982
    %vm126 = vcmp.lt.s32.totalorder %v20, 0
    %v127 = vand.u32 %v20, 2139095040
    %v128 = vshrl.u32 %v127, 23
    %v129 = vsub.s32 %v128, 127
    %v130 = vand.u32 2147483647, %v20
    %v131 = vand.u32 %v130, 8388607
    %v132 = vor.u32 %v131, 8388608
    %v133 = vsub.s32 0, %v132
    %v134 = vadd.s32 %v129, 1
    %vm135 = vcmp.gt.s32.totalorder %v134, 0
    %v136 = vsel %vm135, %v134, 0
    %v137 = vshrl.u32 %v136, 5
    %v138 = vand.u32 %v136, 31
    %v139 = vsub.s32 32, %v138
    %v140 = vshrl.u32 683565275, %v139
    %v141 = vshll.u32 683565275, %v138
    %v142 = vshrl.u32 2475754826, %v139
    %v143 = vor.u32 %v141, %v142
    %v144 = vshll.u32 2475754826, %v138
    %v145 = vshrl.u32 2131351028, %v139
    %v146 = vor.u32 %v144, %v145
    %v147 = vshll.u32 2131351028, %v138
    %v148 = vshrl.u32 2102212464, %v139
    %v149 = vor.u32 %v147, %v148
    %v150 = vshll.u32 2102212464, %v138
    %v151 = vshrl.u32 920167782, %v139
    %v152 = vor.u32 %v150, %v151
    %v153 = vshll.u32 920167782, %v138
    %v154 = vshrl.u32 1326507024, %v139
    %v155 = vor.u32 %v153, %v154
    %vm156 = vcmp.lt.s32.totalorder %v137, 1
    %vm157 = vcmp.lt.s32.totalorder %v137, 2
    %vm158 = vcmp.lt.s32.totalorder %v137, 3
    %vm159 = vcmp.lt.s32.totalorder %v137, 4
    %v160 = vsel %vm156, %v140, %v143
    %v161 = vsel %vm159, %v149, 2102212464
    %v162 = vsel %vm158, %v146, %v161
    %v163 = vsel %vm157, %v160, %v162
    %v164 = vsel %vm156, %v143, %v146
    %v165 = vsel %vm159, %v152, 920167782
    %v166 = vsel %vm158, %v149, %v165
    %v167 = vsel %vm157, %v164, %v166
    %v168 = vsel %vm156, %v146, %v149
    %v169 = vsel %vm159, %v155, 1326507024
    %v170 = vsel %vm158, %v152, %v169
    %v171 = vsel %vm157, %v168, %v170
    %v172 = vshll.u32 %v132, 8
    %v173 = vmul.u32.u64.compose %v172, %v171
    %v174 = vextract.low.u32 %v173
    %v175 = vextract.high.u32 %v173
    %v176 = vmul.u32.u64.compose %v172, %v167
    %v177 = vextract.low.u32 %v176
    %v178 = vextract.high.u32 %v176
    %v179 = vmul.u32 %v172, %v163
    %v180 = vadd.s32 %v175, %v177
    %vm181 = vc.u32 %v175, %v177
    %v182 = vadd.s32 %v178, 1
    %v183 = vsel %vm181, %v182, %v178
    %v184 = vadd.s32 %v179, %v183
    %v185 = vadd.s32 %v184, 536870912
    %v186 = vshrl.u32 %v185, 30
    %v187 = vshll.u32 %v186, 30
    %v188 = vsub.s32 %v184, %v187
    %vm189 = vcmp.lt.s32.totalorder %v188, 0
    %v190 = vsub.s32 0, %v188
    %v191 = vsel %vm189, %v190, %v188
    %v192 = vclz %v191
    %v193 = vsub.s32 %v192, 2
    %vm194 = vcmp.gt.s32.totalorder 0, %v193
    %v195 = vsel %vm194, 0, %v193
    %v196 = vsub.s32 32, %v195
    %v197 = vshll.u32 %v188, %v195
    %v198 = vshrl.u32 %v180, %v196
    %v199 = vor.u32 %v197, %v198
    %v200 = vsub.s32 4294967266, %v195
    %v201 = vadd.s32 %v200, 127
    %v202 = vshll.u32 %v201, 23
    %v203 = vor.u32 4788187, %v202
    %v204 = vand.u32 2147483647, %v203
    %v206 = vcvt.s32.f32 %v199
    %v207 = vmul.f32 %v206, %v204
    %v208 = vxor.u32 %v207, 2147483648
    %v209 = vsel %vm126, %v208, %v207
    %v210 = vsub.s32 4, %v186
    %v211 = vsel %vm126, %v210, %v186
    %v212 = vsel %vm125, %v20, %v209
    %v213 = vsel %vm125, 0, %v211
    %v214 = vcosq.f32.pop %v212
    %v215 = vsinq.f32.pop %v212
    %vm216 = vweird.f32 %v20
    %v217 = vadd.s32 %v213, 3
    %v218 = vand.u32 %v217, 3
    %vm219 = vcmp.lt.s32.totalorder %v218, 2
    %vm220 = vcmp.eq.s32.totalorder %v218, 0
    %v221 = vxor.u32 %v215, 2147483648
    %v222 = vsel %vm220, %v214, %v221
    %vm223 = vcmp.eq.s32.totalorder %v218, 2
    %v224 = vxor.u32 %v214, 2147483648
    %v225 = vsel %vm223, %v224, %v215
    %v226 = vsel %vm219, %v222, %v225
    %v227 = vsel %vm216, nan, %v226
    %v228 = vsub.f32 %v227, %v123
    %v229 = vld [vmem:[%s3] sm:$0xff]
    %v230 = vld [vmem:[%s3 + $0x8] sm:$0xff]
    %232 = vset.pattern.permute.xlu0 0
    %233 = vperm.xlu0 %232, %v229
    %v234 = vpop.permute.xlu0 %233
    %237 = vset.pattern.permute.xlu0 0
    %238 = vperm.xlu0 %237, %v230
    %v239 = vpop.permute.xlu0 %238
    %v241 = vlaneseq
    %v242 = vshrl.u32 %v241, 7
    %v243 = vsub.s32 0, %v242
    %v244 = vrot.slane %v228, %v243
    %v245 = vmul.f32 %v234, %v244
    %v246 = vmul.f32 %v239, %v244
    %v247 = vlaneseq
    %v248 = vshrl.u32 %v247, 7
    %v249 = vsub.s32 0, %v248
    %v250 = vrot.slane %v123, %v249
    %v251 = vadd.f32 %v250, %v245
    %v252 = vadd.f32 %v250, %v246
    %253 = vset.pattern.permute.xlu0 1
    %254 = vperm.xlu0 %253, %v229
    %v255 = vpop.permute.xlu0 %254
    %257 = vset.pattern.permute.xlu0 1
    %258 = vperm.xlu0 %257, %v230
    %v259 = vpop.permute.xlu0 %258
    %v261 = vlaneseq
    %v262 = vshrl.u32 %v261, 7
    %v263 = vsub.s32 1, %v262
    %v264 = vrot.slane %v228, %v263
    %v265 = vmul.f32 %v255, %v264
    %v266 = vmul.f32 %v259, %v264
    %v267 = vlaneseq
    %v268 = vshrl.u32 %v267, 7
    %v269 = vsub.s32 1, %v268
    %v270 = vrot.slane %v123, %v269
    %v271 = vadd.f32 %v270, %v265
    %v272 = vadd.f32 %v270, %v266
    %v273 = vmul.f32 %v251, %v271
    %v274 = vmul.f32 %v252, %v272
    %275 = vset.pattern.permute.xlu0 2
    %276 = vperm.xlu0 %275, %v229
    %v277 = vpop.permute.xlu0 %276
    %279 = vset.pattern.permute.xlu0 2
    %280 = vperm.xlu0 %279, %v230
    %v281 = vpop.permute.xlu0 %280
    %v283 = vlaneseq
    %v284 = vshrl.u32 %v283, 7
    %v285 = vsub.s32 2, %v284
    %v286 = vrot.slane %v228, %v285
    %v287 = vmul.f32 %v277, %v286
    %v288 = vmul.f32 %v281, %v286
    %v289 = vlaneseq
    %v290 = vshrl.u32 %v289, 7
    %v291 = vsub.s32 2, %v290
    %v292 = vrot.slane %v123, %v291
    %v293 = vadd.f32 %v292, %v287
    %v294 = vadd.f32 %v292, %v288
    %v295 = vmul.f32 %v273, %v293
    %v296 = vmul.f32 %v274, %v294
    %297 = vset.pattern.permute.xlu0 3
    %298 = vperm.xlu0 %297, %v229
    %v299 = vpop.permute.xlu0 %298
    %301 = vset.pattern.permute.xlu0 3
    %302 = vperm.xlu0 %301, %v230
    %v303 = vpop.permute.xlu0 %302
    %v305 = vlaneseq
    %v306 = vshrl.u32 %v305, 7
    %v307 = vsub.s32 3, %v306
    %v308 = vrot.slane %v228, %v307
    %v309 = vmul.f32 %v299, %v308
    %v310 = vmul.f32 %v303, %v308
    %v311 = vlaneseq
    %v312 = vshrl.u32 %v311, 7
    %v313 = vsub.s32 3, %v312
    %v314 = vrot.slane %v123, %v313
    %v315 = vadd.f32 %v314, %v309
    %v316 = vadd.f32 %v314, %v310
    %v317 = vmul.f32 %v295, %v315
    %v318 = vmul.f32 %v296, %v316
    %v319 = vld [vmem:[%s1] sm:$0xff]
    %v320 = vld [vmem:[%s1 + $0x8] sm:$0xff]
    %v321 = vld [vmem:[%s1 + $0x10] sm:$0xff]
    %v322 = vld [vmem:[%s1 + $0x18] sm:$0xff]
    %vm323 = vcmask 130048
    %v325 = vsel %vm323, %v319, 0
    %v328 = vsel %vm323, %v320, 0
    %v331 = vsel %vm323, %v321, 0
    %v334 = vsel %vm323, %v322, 0
    %336 = vmatprep.subr.mxu0 0.0
    %v337 = vand.u32 %v317, 4294901760
    %338 = vmatpush1.msra.mxu0 %v337
    %339 = vmatprep.subr.mxu0 0.0
    %v340 = vand.u32 %v318, 4294901760
    %341 = vmatpush1.msra.mxu0 %v340
    %342 = vmatprep.subr.mxu0 0.0
    %343 = vmatpush1.msra.mxu0 0.0
    %344 = vmatprep.subr.mxu0 0.0
    %345 = vmatpush1.msra.mxu0 0.0
    %346 = vmatprep.subr.mxu0 0.0
    %347 = vmatpush1.msra.mxu0 0.0
    %348 = vmatprep.subr.mxu0 0.0
    %349 = vmatpush1.msra.mxu0 0.0
    %350 = vmatprep.subr.mxu0 0.0
    %351 = vmatpush1.msra.mxu0 0.0
    %352 = vmatprep.subr.mxu0 0.0
    %353 = vmatpush1.msra.mxu0 0.0
    %354 = vmatprep.subr.mxu0 0.0
    %355 = vmatpush1.msra.mxu0 0.0
    %356 = vmatprep.subr.mxu0 0.0
    %357 = vmatpush1.msra.mxu0 0.0
    %358 = vmatprep.subr.mxu0 0.0
    %359 = vmatpush1.msra.mxu0 0.0
    %360 = vmatprep.subr.mxu0 0.0
    %361 = vmatpush1.msra.mxu0 0.0
    %362 = vmatprep.subr.mxu0 0.0
    %363 = vmatpush1.msra.mxu0 0.0
    %364 = vmatprep.subr.mxu0 0.0
    %365 = vmatpush1.msra.mxu0 0.0
    %366 = vmatprep.subr.mxu0 0.0
    %367 = vmatpush1.msra.mxu0 0.0
    %368 = vmatprep.subr.mxu0 0.0
    %369 = vmatpush1.msra.mxu0 0.0
    %370 = vmatprep.subr.mxu0 0.0
    %371 = vmatpush1.msra.mxu0 0.0
    %372 = vmatprep.subr.mxu0 0.0
    %373 = vmatpush1.msra.mxu0 0.0
    %374 = vmatprep.subr.mxu0 0.0
    %375 = vmatpush1.msra.mxu0 0.0
    %376 = vmatprep.subr.mxu0 0.0
    %377 = vmatpush1.msra.mxu0 0.0
    %378 = vmatprep.subr.mxu0 0.0
    %379 = vmatpush1.msra.mxu0 0.0
    %380 = vmatprep.subr.mxu0 0.0
    %381 = vmatpush1.msra.mxu0 0.0
    %382 = vmatprep.subr.mxu0 0.0
    %383 = vmatpush1.msra.mxu0 0.0
    %384 = vmatprep.subr.mxu0 0.0
    %385 = vmatpush1.msra.mxu0 0.0
    %386 = vmatprep.subr.mxu0 0.0
    %387 = vmatpush1.msra.mxu0 0.0
    %388 = vmatprep.subr.mxu0 0.0
    %389 = vmatpush1.msra.mxu0 0.0
    %390 = vmatprep.subr.mxu0 0.0
    %391 = vmatpush1.msra.mxu0 0.0
    %392 = vmatprep.subr.mxu0 0.0
    %393 = vmatpush1.msra.mxu0 0.0
    %394 = vmatprep.subr.mxu0 0.0
    %395 = vmatpush1.msra.mxu0 0.0
    %396 = vmatprep.subr.mxu0 0.0
    %397 = vmatpush1.msra.mxu0 0.0
    %398 = vmatprep.subr.mxu0 0.0
    %399 = vmatpush1.msra.mxu0 0.0
    %400 = vmatprep.subr.mxu0 0.0
    %401 = vmatpush1.msra.mxu0 0.0
    %402 = vmatprep.mubr.f32.mxu0 0.0
    %v403 = vand.u32 %v325, 4294901760
    %v404 = vsub.f32 %v325, %v403
    %v405 = vand.u32 %v404, 4294901760
    %v406 = vsub.f32 %v404, %v405
    %v407 = vand.u32 %v406, 4294901760
    %408 = vmatmul.mubr.f32.gmra.mrb[0].mxu0 %v407
    %v409 = vpop.f32.mrb[0].mxu0
    %v410 = vadd.f32 0.0, %v409
    %v411 = vpop.f32.mrb[0].mxu0
    %412 = vmatprep.mubr.f32.mxu0 0.0
    %v413 = vand.u32 %v328, 4294901760
    %v414 = vsub.f32 %v328, %v413
    %v415 = vand.u32 %v414, 4294901760
    %v416 = vsub.f32 %v414, %v415
    %v417 = vand.u32 %v416, 4294901760
    %418 = vmatmul.mubr.f32.gmra.mrb[0].mxu0 %v417
    %v419 = vpop.f32.mrb[0].mxu0
    %v420 = vadd.f32 0.0, %v419
    %v421 = vpop.f32.mrb[0].mxu0
    %422 = vmatprep.mubr.f32.mxu0 0.0
    %v423 = vand.u32 %v331, 4294901760
    %v424 = vsub.f32 %v331, %v423
    %v425 = vand.u32 %v424, 4294901760
    %v426 = vsub.f32 %v424, %v425
    %v427 = vand.u32 %v426, 4294901760
    %428 = vmatmul.mubr.f32.gmra.mrb[0].mxu0 %v427
    %v429 = vpop.f32.mrb[0].mxu0
    %v430 = vadd.f32 0.0, %v429
    %v431 = vpop.f32.mrb[0].mxu0
    %432 = vmatprep.mubr.f32.mxu0 0.0
    %v433 = vand.u32 %v334, 4294901760
    %v434 = vsub.f32 %v334, %v433
    %v435 = vand.u32 %v434, 4294901760
    %v436 = vsub.f32 %v434, %v435
    %v437 = vand.u32 %v436, 4294901760
    %438 = vmatmul.mubr.f32.gmra.mrb[0].mxu0 %v437
    %v439 = vpop.f32.mrb[0].mxu0
    %v440 = vadd.f32 0.0, %v439
    %v441 = vpop.f32.mrb[0].mxu0
    %442 = vdwg.mxu0
    %443 = vmatprep.subr.mxu0 0.0
    %v444 = vand.u32 %v317, 4294901760
    %v445 = vsub.f32 %v317, %v444
    %v446 = vand.u32 %v445, 4294901760
    %v447 = vsub.f32 %v445, %v446
    %v448 = vand.u32 %v447, 4294901760
    %449 = vmatpush1.msra.mxu0 %v448
    %450 = vmatprep.subr.mxu0 0.0
    %v451 = vand.u32 %v318, 4294901760
    %v452 = vsub.f32 %v318, %v451
    %v453 = vand.u32 %v452, 4294901760
    %v454 = vsub.f32 %v452, %v453
    %v455 = vand.u32 %v454, 4294901760
    %456 = vmatpush1.msra.mxu0 %v455
    %457 = vmatprep.subr.mxu0 0.0
    %458 = vmatpush1.msra.mxu0 0.0
    %459 = vmatprep.subr.mxu0 0.0
    %460 = vmatpush1.msra.mxu0 0.0
    %461 = vmatprep.subr.mxu0 0.0
    %462 = vmatpush1.msra.mxu0 0.0
    %463 = vmatprep.subr.mxu0 0.0
    %464 = vmatpush1.msra.mxu0 0.0
    %465 = vmatprep.subr.mxu0 0.0
    %466 = vmatpush1.msra.mxu0 0.0
    %467 = vmatprep.subr.mxu0 0.0
    %468 = vmatpush1.msra.mxu0 0.0
    %469 = vmatprep.subr.mxu0 0.0
    %470 = vmatpush1.msra.mxu0 0.0
    %471 = vmatprep.subr.mxu0 0.0
    %472 = vmatpush1.msra.mxu0 0.0
    %473 = vmatprep.subr.mxu0 0.0
    %474 = vmatpush1.msra.mxu0 0.0
    %475 = vmatprep.subr.mxu0 0.0
    %476 = vmatpush1.msra.mxu0 0.0
    %477 = vmatprep.subr.mxu0 0.0
    %478 = vmatpush1.msra.mxu0 0.0
    %479 = vmatprep.subr.mxu0 0.0
    %480 = vmatpush1.msra.mxu0 0.0
    %481 = vmatprep.subr.mxu0 0.0
    %482 = vmatpush1.msra.mxu0 0.0
    %483 = vmatprep.subr.mxu0 0.0
    %484 = vmatpush1.msra.mxu0 0.0
    %485 = vmatprep.subr.mxu0 0.0
    %486 = vmatpush1.msra.mxu0 0.0
    %487 = vmatprep.subr.mxu0 0.0
    %488 = vmatpush1.msra.mxu0 0.0
    %489 = vmatprep.subr.mxu0 0.0
    %490 = vmatpush1.msra.mxu0 0.0
    %491 = vmatprep.subr.mxu0 0.0
    %492 = vmatpush1.msra.mxu0 0.0
    %493 = vmatprep.subr.mxu0 0.0
    %494 = vmatpush1.msra.mxu0 0.0
    %495 = vmatprep.subr.mxu0 0.0
    %496 = vmatpush1.msra.mxu0 0.0
    %497 = vmatprep.subr.mxu0 0.0
    %498 = vmatpush1.msra.mxu0 0.0
    %499 = vmatprep.subr.mxu0 0.0
    %500 = vmatpush1.msra.mxu0 0.0
    %501 = vmatprep.subr.mxu0 0.0
    %502 = vmatpush1.msra.mxu0 0.0
    %503 = vmatprep.subr.mxu0 0.0
    %504 = vmatpush1.msra.mxu0 0.0
    %505 = vmatprep.subr.mxu0 0.0
    %506 = vmatpush1.msra.mxu0 0.0
    %507 = vmatprep.subr.mxu0 0.0
    %508 = vmatpush1.msra.mxu0 0.0
    %509 = vmatprep.subr.mxu0 0.0
    %510 = vmatpush1.msra.mxu0 0.0
    %511 = vmatprep.subr.mxu0 0.0
    %512 = vmatpush1.msra.mxu0 0.0
    %513 = vmatprep.subr.mxu0 0.0
    %514 = vmatpush1.msra.mxu0 0.0
    %515 = vmatprep.subr.mxu0 0.0
    %516 = vmatpush1.msra.mxu0 0.0
    %517 = vmatprep.mubr.f32.mxu0 0.0
    %v518 = vand.u32 %v325, 4294901760
    %519 = vmatmul.mubr.f32.gmra.mrb[0].mxu0 %v518
    %v520 = vpop.f32.mrb[0].mxu0
    %v521 = vadd.f32 %v410, %v520
    %v522 = vpop.f32.mrb[0].mxu0
    %523 = vmatprep.mubr.f32.mxu0 0.0
    %v524 = vand.u32 %v328, 4294901760
    %525 = vmatmul.mubr.f32.gmra.mrb[0].mxu0 %v524
    %v526 = vpop.f32.mrb[0].mxu0
    %v527 = vadd.f32 %v420, %v526
    %v528 = vpop.f32.mrb[0].mxu0
    %529 = vmatprep.mubr.f32.mxu0 0.0
    %v530 = vand.u32 %v331, 4294901760
    %531 = vmatmul.mubr.f32.gmra.mrb[0].mxu0 %v530
    %v532 = vpop.f32.mrb[0].mxu0
    %v533 = vadd.f32 %v430, %v532
    %v534 = vpop.f32.mrb[0].mxu0
    %535 = vmatprep.mubr.f32.mxu0 0.0
    %v536 = vand.u32 %v334, 4294901760
    %537 = vmatmul.mubr.f32.gmra.mrb[0].mxu0 %v536
    %v538 = vpop.f32.mrb[0].mxu0
    %v539 = vadd.f32 %v440, %v538
    %v540 = vpop.f32.mrb[0].mxu0
    %541 = vdwg.mxu0
    %542 = vmatprep.subr.mxu0 0.0
    %v543 = vand.u32 %v317, 4294901760
    %v544 = vsub.f32 %v317, %v543
    %545 = vmatpush1.msra.mxu0 %v544
    %546 = vmatprep.subr.mxu0 0.0
    %v547 = vand.u32 %v318, 4294901760
    %v548 = vsub.f32 %v318, %v547
    %549 = vmatpush1.msra.mxu0 %v548
    %550 = vmatprep.subr.mxu0 0.0
    %551 = vmatpush1.msra.mxu0 0.0
    %552 = vmatprep.subr.mxu0 0.0
    %553 = vmatpush1.msra.mxu0 0.0
    %554 = vmatprep.subr.mxu0 0.0
    %555 = vmatpush1.msra.mxu0 0.0
    %556 = vmatprep.subr.mxu0 0.0
    %557 = vmatpush1.msra.mxu0 0.0
    %558 = vmatprep.subr.mxu0 0.0
    %559 = vmatpush1.msra.mxu0 0.0
    %560 = vmatprep.subr.mxu0 0.0
    %561 = vmatpush1.msra.mxu0 0.0
    %562 = vmatprep.subr.mxu0 0.0
    %563 = vmatpush1.msra.mxu0 0.0
    %564 = vmatprep.subr.mxu0 0.0
    %565 = vmatpush1.msra.mxu0 0.0
    %566 = vmatprep.subr.mxu0 0.0
    %567 = vmatpush1.msra.mxu0 0.0
    %568 = vmatprep.subr.mxu0 0.0
    %569 = vmatpush1.msra.mxu0 0.0
    %570 = vmatprep.subr.mxu0 0.0
    %571 = vmatpush1.msra.mxu0 0.0
    %572 = vmatprep.subr.mxu0 0.0
    %573 = vmatpush1.msra.mxu0 0.0
    %574 = vmatprep.subr.mxu0 0.0
    %575 = vmatpush1.msra.mxu0 0.0
    %576 = vmatprep.subr.mxu0 0.0
    %577 = vmatpush1.msra.mxu0 0.0
    %578 = vmatprep.subr.mxu0 0.0
    %579 = vmatpush1.msra.mxu0 0.0
    %580 = vmatprep.subr.mxu0 0.0
    %581 = vmatpush1.msra.mxu0 0.0
    %582 = vmatprep.subr.mxu0 0.0
    %583 = vmatpush1.msra.mxu0 0.0
    %584 = vmatprep.subr.mxu0 0.0
    %585 = vmatpush1.msra.mxu0 0.0
    %586 = vmatprep.subr.mxu0 0.0
    %587 = vmatpush1.msra.mxu0 0.0
    %588 = vmatprep.subr.mxu0 0.0
    %589 = vmatpush1.msra.mxu0 0.0
    %590 = vmatprep.subr.mxu0 0.0
    %591 = vmatpush1.msra.mxu0 0.0
    %592 = vmatprep.subr.mxu0 0.0
    %593 = vmatpush1.msra.mxu0 0.0
    %594 = vmatprep.subr.mxu0 0.0
    %595 = vmatpush1.msra.mxu0 0.0
    %596 = vmatprep.subr.mxu0 0.0
    %597 = vmatpush1.msra.mxu0 0.0
    %598 = vmatprep.subr.mxu0 0.0
    %599 = vmatpush1.msra.mxu0 0.0
    %600 = vmatprep.subr.mxu0 0.0
    %601 = vmatpush1.msra.mxu0 0.0
    %602 = vmatprep.subr.mxu0 0.0
    %603 = vmatpush1.msra.mxu0 0.0
    %604 = vmatprep.subr.mxu0 0.0
    %605 = vmatpush1.msra.mxu0 0.0
    %606 = vmatprep.subr.mxu0 0.0
    %607 = vmatpush1.msra.mxu0 0.0
    %608 = vmatprep.subr.mxu0 0.0
    %609 = vmatpush1.msra.mxu0 0.0
    %610 = vmatprep.mubr.f32.mxu0 0.0
    %v611 = vand.u32 %v325, 4294901760
    %v612 = vsub.f32 %v325, %v611
    %613 = vmatmul.mubr.f32.gmra.mrb[0].mxu0 %v612
    %v614 = vpop.f32.mrb[0].mxu0
    %v615 = vadd.f32 %v521, %v614
    %v616 = vpop.f32.mrb[0].mxu0
    %617 = vmatprep.mubr.f32.mxu0 0.0
    %v618 = vand.u32 %v328, 4294901760
    %v619 = vsub.f32 %v328, %v618
    %620 = vmatmul.mubr.f32.gmra.mrb[0].mxu0 %v619
    %v621 = vpop.f32.mrb[0].mxu0
    %v622 = vadd.f32 %v527, %v621
    %v623 = vpop.f32.mrb[0].mxu0
    %624 = vmatprep.mubr.f32.mxu0 0.0
    %v625 = vand.u32 %v331, 4294901760
    %v626 = vsub.f32 %v331, %v625
    %627 = vmatmul.mubr.f32.gmra.mrb[0].mxu0 %v626
    %v628 = vpop.f32.mrb[0].mxu0
    %v629 = vadd.f32 %v533, %v628
    %v630 = vpop.f32.mrb[0].mxu0
    %631 = vmatprep.mubr.f32.mxu0 0.0
    %v632 = vand.u32 %v334, 4294901760
    %v633 = vsub.f32 %v334, %v632
    %634 = vmatmul.mubr.f32.gmra.mrb[0].mxu0 %v633
    %v635 = vpop.f32.mrb[0].mxu0
    %v636 = vadd.f32 %v539, %v635
    %v637 = vpop.f32.mrb[0].mxu0
    %638 = vdwg.mxu0
    %639 = vmatprep.subr.mxu0 0.0
    %v640 = vand.u32 %v317, 4294901760
    %641 = vmatpush1.msra.mxu0 %v640
    %642 = vmatprep.subr.mxu0 0.0
    %v643 = vand.u32 %v318, 4294901760
    %644 = vmatpush1.msra.mxu0 %v643
    %645 = vmatprep.subr.mxu0 0.0
    %646 = vmatpush1.msra.mxu0 0.0
    %647 = vmatprep.subr.mxu0 0.0
    %648 = vmatpush1.msra.mxu0 0.0
    %649 = vmatprep.subr.mxu0 0.0
    %650 = vmatpush1.msra.mxu0 0.0
    %651 = vmatprep.subr.mxu0 0.0
    %652 = vmatpush1.msra.mxu0 0.0
    %653 = vmatprep.subr.mxu0 0.0
    %654 = vmatpush1.msra.mxu0 0.0
    %655 = vmatprep.subr.mxu0 0.0
    %656 = vmatpush1.msra.mxu0 0.0
    %657 = vmatprep.subr.mxu0 0.0
    %658 = vmatpush1.msra.mxu0 0.0
    %659 = vmatprep.subr.mxu0 0.0
    %660 = vmatpush1.msra.mxu0 0.0
    %661 = vmatprep.subr.mxu0 0.0
    %662 = vmatpush1.msra.mxu0 0.0
    %663 = vmatprep.subr.mxu0 0.0
    %664 = vmatpush1.msra.mxu0 0.0
    %665 = vmatprep.subr.mxu0 0.0
    %666 = vmatpush1.msra.mxu0 0.0
    %667 = vmatprep.subr.mxu0 0.0
    %668 = vmatpush1.msra.mxu0 0.0
    %669 = vmatprep.subr.mxu0 0.0
    %670 = vmatpush1.msra.mxu0 0.0
    %671 = vmatprep.subr.mxu0 0.0
    %672 = vmatpush1.msra.mxu0 0.0
    %673 = vmatprep.subr.mxu0 0.0
    %674 = vmatpush1.msra.mxu0 0.0
    %675 = vmatprep.subr.mxu0 0.0
    %676 = vmatpush1.msra.mxu0 0.0
    %677 = vmatprep.subr.mxu0 0.0
    %678 = vmatpush1.msra.mxu0 0.0
    %679 = vmatprep.subr.mxu0 0.0
    %680 = vmatpush1.msra.mxu0 0.0
    %681 = vmatprep.subr.mxu0 0.0
    %682 = vmatpush1.msra.mxu0 0.0
    %683 = vmatprep.subr.mxu0 0.0
    %684 = vmatpush1.msra.mxu0 0.0
    %685 = vmatprep.subr.mxu0 0.0
    %686 = vmatpush1.msra.mxu0 0.0
    %687 = vmatprep.subr.mxu0 0.0
    %688 = vmatpush1.msra.mxu0 0.0
    %689 = vmatprep.subr.mxu0 0.0
    %690 = vmatpush1.msra.mxu0 0.0
    %691 = vmatprep.subr.mxu0 0.0
    %692 = vmatpush1.msra.mxu0 0.0
    %693 = vmatprep.subr.mxu0 0.0
    %694 = vmatpush1.msra.mxu0 0.0
    %695 = vmatprep.subr.mxu0 0.0
    %696 = vmatpush1.msra.mxu0 0.0
    %697 = vmatprep.subr.mxu0 0.0
    %698 = vmatpush1.msra.mxu0 0.0
    %699 = vmatprep.subr.mxu0 0.0
    %700 = vmatpush1.msra.mxu0 0.0
    %701 = vmatprep.subr.mxu0 0.0
    %702 = vmatpush1.msra.mxu0 0.0
    %703 = vmatprep.subr.mxu0 0.0
    %704 = vmatpush1.msra.mxu0 0.0
    %705 = vmatprep.mubr.f32.mxu0 0.0
    %v706 = vand.u32 %v325, 4294901760
    %v707 = vsub.f32 %v325, %v706
    %v708 = vand.u32 %v707, 4294901760
    %709 = vmatmul.mubr.f32.gmra.mrb[0].mxu0 %v708
    %v710 = vpop.f32.mrb[0].mxu0
    %v711 = vadd.f32 %v615, %v710
    %v712 = vpop.f32.mrb[0].mxu0
    %713 = vmatprep.mubr.f32.mxu0 0.0
    %v714 = vand.u32 %v328, 4294901760
    %v715 = vsub.f32 %v328, %v714
    %v716 = vand.u32 %v715, 4294901760
    %717 = vmatmul.mubr.f32.gmra.mrb[0].mxu0 %v716
    %v718 = vpop.f32.mrb[0].mxu0
    %v719 = vadd.f32 %v622, %v718
    %v720 = vpop.f32.mrb[0].mxu0
    %721 = vmatprep.mubr.f32.mxu0 0.0
    %v722 = vand.u32 %v331, 4294901760
    %v723 = vsub.f32 %v331, %v722
    %v724 = vand.u32 %v723, 4294901760
    %725 = vmatmul.mubr.f32.gmra.mrb[0].mxu0 %v724
    %v726 = vpop.f32.mrb[0].mxu0
    %v727 = vadd.f32 %v629, %v726
    %v728 = vpop.f32.mrb[0].mxu0
    %729 = vmatprep.mubr.f32.mxu0 0.0
    %v730 = vand.u32 %v334, 4294901760
    %v731 = vsub.f32 %v334, %v730
    %v732 = vand.u32 %v731, 4294901760
    %733 = vmatmul.mubr.f32.gmra.mrb[0].mxu0 %v732
    %v734 = vpop.f32.mrb[0].mxu0
    %v735 = vadd.f32 %v636, %v734
    %v736 = vpop.f32.mrb[0].mxu0
    %737 = vdwg.mxu0
    %738 = vmatprep.subr.mxu0 0.0
    %v739 = vand.u32 %v317, 4294901760
    %v740 = vsub.f32 %v317, %v739
    %v741 = vand.u32 %v740, 4294901760
    %742 = vmatpush1.msra.mxu0 %v741
    %743 = vmatprep.subr.mxu0 0.0
    %v744 = vand.u32 %v318, 4294901760
    %v745 = vsub.f32 %v318, %v744
    %v746 = vand.u32 %v745, 4294901760
    %747 = vmatpush1.msra.mxu0 %v746
    %748 = vmatprep.subr.mxu0 0.0
    %749 = vmatpush1.msra.mxu0 0.0
    %750 = vmatprep.subr.mxu0 0.0
    %751 = vmatpush1.msra.mxu0 0.0
    %752 = vmatprep.subr.mxu0 0.0
    %753 = vmatpush1.msra.mxu0 0.0
    %754 = vmatprep.subr.mxu0 0.0
    %755 = vmatpush1.msra.mxu0 0.0
    %756 = vmatprep.subr.mxu0 0.0
    %757 = vmatpush1.msra.mxu0 0.0
    %758 = vmatprep.subr.mxu0 0.0
    %759 = vmatpush1.msra.mxu0 0.0
    %760 = vmatprep.subr.mxu0 0.0
    %761 = vmatpush1.msra.mxu0 0.0
    %762 = vmatprep.subr.mxu0 0.0
    %763 = vmatpush1.msra.mxu0 0.0
    %764 = vmatprep.subr.mxu0 0.0
    %765 = vmatpush1.msra.mxu0 0.0
    %766 = vmatprep.subr.mxu0 0.0
    %767 = vmatpush1.msra.mxu0 0.0
    %768 = vmatprep.subr.mxu0 0.0
    %769 = vmatpush1.msra.mxu0 0.0
    %770 = vmatprep.subr.mxu0 0.0
    %771 = vmatpush1.msra.mxu0 0.0
    %772 = vmatprep.subr.mxu0 0.0
    %773 = vmatpush1.msra.mxu0 0.0
    %774 = vmatprep.subr.mxu0 0.0
    %775 = vmatpush1.msra.mxu0 0.0
    %776 = vmatprep.subr.mxu0 0.0
    %777 = vmatpush1.msra.mxu0 0.0
    %778 = vmatprep.subr.mxu0 0.0
    %779 = vmatpush1.msra.mxu0 0.0
    %780 = vmatprep.subr.mxu0 0.0
    %781 = vmatpush1.msra.mxu0 0.0
    %782 = vmatprep.subr.mxu0 0.0
    %783 = vmatpush1.msra.mxu0 0.0
    %784 = vmatprep.subr.mxu0 0.0
    %785 = vmatpush1.msra.mxu0 0.0
    %786 = vmatprep.subr.mxu0 0.0
    %787 = vmatpush1.msra.mxu0 0.0
    %788 = vmatprep.subr.mxu0 0.0
    %789 = vmatpush1.msra.mxu0 0.0
    %790 = vmatprep.subr.mxu0 0.0
    %791 = vmatpush1.msra.mxu0 0.0
    %792 = vmatprep.subr.mxu0 0.0
    %793 = vmatpush1.msra.mxu0 0.0
    %794 = vmatprep.subr.mxu0 0.0
    %795 = vmatpush1.msra.mxu0 0.0
    %796 = vmatprep.subr.mxu0 0.0
    %797 = vmatpush1.msra.mxu0 0.0
    %798 = vmatprep.subr.mxu0 0.0
    %799 = vmatpush1.msra.mxu0 0.0
    %800 = vmatprep.subr.mxu0 0.0
    %801 = vmatpush1.msra.mxu0 0.0
    %802 = vmatprep.subr.mxu0 0.0
    %803 = vmatpush1.msra.mxu0 0.0
    %804 = vmatprep.subr.mxu0 0.0
    %805 = vmatpush1.msra.mxu0 0.0
    %806 = vmatprep.subr.mxu0 0.0
    %807 = vmatpush1.msra.mxu0 0.0
    %808 = vmatprep.mubr.f32.mxu0 0.0
    %v809 = vand.u32 %v325, 4294901760
    %810 = vmatmul.mubr.f32.gmra.mrb[0].mxu0 %v809
    %v811 = vpop.f32.mrb[0].mxu0
    %v812 = vadd.f32 %v711, %v811
    %v813 = vpop.f32.mrb[0].mxu0
    %814 = vmatprep.mubr.f32.mxu0 0.0
    %v815 = vand.u32 %v328, 4294901760
    %816 = vmatmul.mubr.f32.gmra.mrb[0].mxu0 %v815
    %v817 = vpop.f32.mrb[0].mxu0
    %v818 = vadd.f32 %v719, %v817
    %v819 = vpop.f32.mrb[0].mxu0
    %820 = vmatprep.mubr.f32.mxu0 0.0
    %v821 = vand.u32 %v331, 4294901760
    %822 = vmatmul.mubr.f32.gmra.mrb[0].mxu0 %v821
    %v823 = vpop.f32.mrb[0].mxu0
    %v824 = vadd.f32 %v727, %v823
    %v825 = vpop.f32.mrb[0].mxu0
    %826 = vmatprep.mubr.f32.mxu0 0.0
    %v827 = vand.u32 %v334, 4294901760
    %828 = vmatmul.mubr.f32.gmra.mrb[0].mxu0 %v827
    %v829 = vpop.f32.mrb[0].mxu0
    %v830 = vadd.f32 %v735, %v829
    %v831 = vpop.f32.mrb[0].mxu0
    %832 = vdwg.mxu0
    %833 = vmatprep.subr.mxu0 0.0
    %v834 = vand.u32 %v317, 4294901760
    %835 = vmatpush1.msra.mxu0 %v834
    %836 = vmatprep.subr.mxu0 0.0
    %v837 = vand.u32 %v318, 4294901760
    %838 = vmatpush1.msra.mxu0 %v837
    %839 = vmatprep.subr.mxu0 0.0
    %840 = vmatpush1.msra.mxu0 0.0
    %841 = vmatprep.subr.mxu0 0.0
    %842 = vmatpush1.msra.mxu0 0.0
    %843 = vmatprep.subr.mxu0 0.0
    %844 = vmatpush1.msra.mxu0 0.0
    %845 = vmatprep.subr.mxu0 0.0
    %846 = vmatpush1.msra.mxu0 0.0
    %847 = vmatprep.subr.mxu0 0.0
    %848 = vmatpush1.msra.mxu0 0.0
    %849 = vmatprep.subr.mxu0 0.0
    %850 = vmatpush1.msra.mxu0 0.0
    %851 = vmatprep.subr.mxu0 0.0
    %852 = vmatpush1.msra.mxu0 0.0
    %853 = vmatprep.subr.mxu0 0.0
    %854 = vmatpush1.msra.mxu0 0.0
    %855 = vmatprep.subr.mxu0 0.0
    %856 = vmatpush1.msra.mxu0 0.0
    %857 = vmatprep.subr.mxu0 0.0
    %858 = vmatpush1.msra.mxu0 0.0
    %859 = vmatprep.subr.mxu0 0.0
    %860 = vmatpush1.msra.mxu0 0.0
    %861 = vmatprep.subr.mxu0 0.0
    %862 = vmatpush1.msra.mxu0 0.0
    %863 = vmatprep.subr.mxu0 0.0
    %864 = vmatpush1.msra.mxu0 0.0
    %865 = vmatprep.subr.mxu0 0.0
    %866 = vmatpush1.msra.mxu0 0.0
    %867 = vmatprep.subr.mxu0 0.0
    %868 = vmatpush1.msra.mxu0 0.0
    %869 = vmatprep.subr.mxu0 0.0
    %870 = vmatpush1.msra.mxu0 0.0
    %871 = vmatprep.subr.mxu0 0.0
    %872 = vmatpush1.msra.mxu0 0.0
    %873 = vmatprep.subr.mxu0 0.0
    %874 = vmatpush1.msra.mxu0 0.0
    %875 = vmatprep.subr.mxu0 0.0
    %876 = vmatpush1.msra.mxu0 0.0
    %877 = vmatprep.subr.mxu0 0.0
    %878 = vmatpush1.msra.mxu0 0.0
    %879 = vmatprep.subr.mxu0 0.0
    %880 = vmatpush1.msra.mxu0 0.0
    %881 = vmatprep.subr.mxu0 0.0
    %882 = vmatpush1.msra.mxu0 0.0
    %883 = vmatprep.subr.mxu0 0.0
    %884 = vmatpush1.msra.mxu0 0.0
    %885 = vmatprep.subr.mxu0 0.0
    %886 = vmatpush1.msra.mxu0 0.0
    %887 = vmatprep.subr.mxu0 0.0
    %888 = vmatpush1.msra.mxu0 0.0
    %889 = vmatprep.subr.mxu0 0.0
    %890 = vmatpush1.msra.mxu0 0.0
    %891 = vmatprep.subr.mxu0 0.0
    %892 = vmatpush1.msra.mxu0 0.0
    %893 = vmatprep.subr.mxu0 0.0
    %894 = vmatpush1.msra.mxu0 0.0
    %895 = vmatprep.subr.mxu0 0.0
    %896 = vmatpush1.msra.mxu0 0.0
    %897 = vmatprep.subr.mxu0 0.0
    %898 = vmatpush1.msra.mxu0 0.0
    %899 = vmatprep.mubr.f32.mxu0 0.0
    %v900 = vand.u32 %v325, 4294901760
    %901 = vmatmul.mubr.f32.gmra.mrb[0].mxu0 %v900
    %v902 = vpop.f32.mrb[0].mxu0
    %v903 = vadd.f32 %v812, %v902
    %v904 = vpop.f32.mrb[0].mxu0
    %905 = vmatprep.mubr.f32.mxu0 0.0
    %v906 = vand.u32 %v328, 4294901760
    %907 = vmatmul.mubr.f32.gmra.mrb[0].mxu0 %v906
    %v908 = vpop.f32.mrb[0].mxu0
    %v909 = vadd.f32 %v818, %v908
    %v910 = vpop.f32.mrb[0].mxu0
    %911 = vmatprep.mubr.f32.mxu0 0.0
    %v912 = vand.u32 %v331, 4294901760
    %913 = vmatmul.mubr.f32.gmra.mrb[0].mxu0 %v912
    %v914 = vpop.f32.mrb[0].mxu0
    %v915 = vadd.f32 %v824, %v914
    %v916 = vpop.f32.mrb[0].mxu0
    %917 = vmatprep.mubr.f32.mxu0 0.0
    %v918 = vand.u32 %v334, 4294901760
    %919 = vmatmul.mubr.f32.gmra.mrb[0].mxu0 %v918
    %v920 = vpop.f32.mrb[0].mxu0
    %v921 = vadd.f32 %v830, %v920
    %v922 = vpop.f32.mrb[0].mxu0
    %923 = vdwg.mxu0
    %v924 = vld [vmem:[%s2] sm:$0xf]
    %v925 = vmul.f32 %v903, %v903
    %v926 = vmul.f32 %v909, %v909
    %v927 = vmul.f32 %v915, %v915
    %v928 = vmul.f32 %v921, %v921
    %vm929 = vcmask 261120
    %v931 = vsel %vm929, %v924, 0
    %933 = vmatprep.subr.mxu0 0.0
    %v934 = vand.u32 %v925, 4294901760
    %935 = vmatpush1.msra.mxu0 %v934
    %936 = vmatprep.subr.mxu0 0.0
    %v937 = vand.u32 %v926, 4294901760
    %938 = vmatpush1.msra.mxu0 %v937
    %939 = vmatprep.subr.mxu0 0.0
    %v940 = vand.u32 %v927, 4294901760
    %941 = vmatpush1.msra.mxu0 %v940
    %942 = vmatprep.subr.mxu0 0.0
    %v943 = vand.u32 %v928, 4294901760
    %944 = vmatpush1.msra.mxu0 %v943
    %945 = vmatprep.subr.mxu0 0.0
    %946 = vmatpush1.msra.mxu0 0.0
    %947 = vmatprep.subr.mxu0 0.0
    %948 = vmatpush1.msra.mxu0 0.0
    %949 = vmatprep.subr.mxu0 0.0
    %950 = vmatpush1.msra.mxu0 0.0
    %951 = vmatprep.subr.mxu0 0.0
    %952 = vmatpush1.msra.mxu0 0.0
    %953 = vmatprep.subr.mxu0 0.0
    %954 = vmatpush1.msra.mxu0 0.0
    %955 = vmatprep.subr.mxu0 0.0
    %956 = vmatpush1.msra.mxu0 0.0
    %957 = vmatprep.subr.mxu0 0.0
    %958 = vmatpush1.msra.mxu0 0.0
    %959 = vmatprep.subr.mxu0 0.0
    %960 = vmatpush1.msra.mxu0 0.0
    %961 = vmatprep.subr.mxu0 0.0
    %962 = vmatpush1.msra.mxu0 0.0
    %963 = vmatprep.subr.mxu0 0.0
    %964 = vmatpush1.msra.mxu0 0.0
    %965 = vmatprep.subr.mxu0 0.0
    %966 = vmatpush1.msra.mxu0 0.0
    %967 = vmatprep.subr.mxu0 0.0
    %968 = vmatpush1.msra.mxu0 0.0
    %969 = vmatprep.subr.mxu0 0.0
    %970 = vmatpush1.msra.mxu0 0.0
    %971 = vmatprep.subr.mxu0 0.0
    %972 = vmatpush1.msra.mxu0 0.0
    %973 = vmatprep.subr.mxu0 0.0
    %974 = vmatpush1.msra.mxu0 0.0
    %975 = vmatprep.subr.mxu0 0.0
    %976 = vmatpush1.msra.mxu0 0.0
    %977 = vmatprep.subr.mxu0 0.0
    %978 = vmatpush1.msra.mxu0 0.0
    %979 = vmatprep.subr.mxu0 0.0
    %980 = vmatpush1.msra.mxu0 0.0
    %981 = vmatprep.subr.mxu0 0.0
    %982 = vmatpush1.msra.mxu0 0.0
    %983 = vmatprep.subr.mxu0 0.0
    %984 = vmatpush1.msra.mxu0 0.0
    %985 = vmatprep.subr.mxu0 0.0
    %986 = vmatpush1.msra.mxu0 0.0
    %987 = vmatprep.subr.mxu0 0.0
    %988 = vmatpush1.msra.mxu0 0.0
    %989 = vmatprep.subr.mxu0 0.0
    %990 = vmatpush1.msra.mxu0 0.0
    %991 = vmatprep.subr.mxu0 0.0
    %992 = vmatpush1.msra.mxu0 0.0
    %993 = vmatprep.subr.mxu0 0.0
    %994 = vmatpush1.msra.mxu0 0.0
    %995 = vmatprep.subr.mxu0 0.0
    %996 = vmatpush1.msra.mxu0 0.0
    %997 = vmatprep.subr.mxu0 0.0
    %998 = vmatpush1.msra.mxu0 0.0
    %999 = vmatprep.subr.mxu0 0.0
    %1000 = vmatpush1.msra.mxu0 0.0
    %1001 = vmatprep.mubr.f32.mxu0 0.0
    %v1002 = vand.u32 %v931, 4294901760
    %v1003 = vsub.f32 %v931, %v1002
    %v1004 = vand.u32 %v1003, 4294901760
    %v1005 = vsub.f32 %v1003, %v1004
    %v1006 = vand.u32 %v1005, 4294901760
    %1007 = vmatmul.mubr.f32.gmra.mrb[0].mxu0 %v1006
    %v1008 = vpop.f32.mrb[0].mxu0
    %v1009 = vadd.f32 0.0, %v1008
    %v1010 = vpop.f32.mrb[0].mxu0
    %1011 = vdwg.mxu0
    %1012 = vmatprep.subr.mxu0 0.0
    %v1013 = vand.u32 %v925, 4294901760
    %v1014 = vsub.f32 %v925, %v1013
    %v1015 = vand.u32 %v1014, 4294901760
    %v1016 = vsub.f32 %v1014, %v1015
    %v1017 = vand.u32 %v1016, 4294901760
    %1018 = vmatpush1.msra.mxu0 %v1017
    %1019 = vmatprep.subr.mxu0 0.0
    %v1020 = vand.u32 %v926, 4294901760
    %v1021 = vsub.f32 %v926, %v1020
    %v1022 = vand.u32 %v1021, 4294901760
    %v1023 = vsub.f32 %v1021, %v1022
    %v1024 = vand.u32 %v1023, 4294901760
    %1025 = vmatpush1.msra.mxu0 %v1024
    %1026 = vmatprep.subr.mxu0 0.0
    %v1027 = vand.u32 %v927, 4294901760
    %v1028 = vsub.f32 %v927, %v1027
    %v1029 = vand.u32 %v1028, 4294901760
    %v1030 = vsub.f32 %v1028, %v1029
    %v1031 = vand.u32 %v1030, 4294901760
    %1032 = vmatpush1.msra.mxu0 %v1031
    %1033 = vmatprep.subr.mxu0 0.0
    %v1034 = vand.u32 %v928, 4294901760
    %v1035 = vsub.f32 %v928, %v1034
    %v1036 = vand.u32 %v1035, 4294901760
    %v1037 = vsub.f32 %v1035, %v1036
    %v1038 = vand.u32 %v1037, 4294901760
    %1039 = vmatpush1.msra.mxu0 %v1038
    %1040 = vmatprep.subr.mxu0 0.0
    %1041 = vmatpush1.msra.mxu0 0.0
    %1042 = vmatprep.subr.mxu0 0.0
    %1043 = vmatpush1.msra.mxu0 0.0
    %1044 = vmatprep.subr.mxu0 0.0
    %1045 = vmatpush1.msra.mxu0 0.0
    %1046 = vmatprep.subr.mxu0 0.0
    %1047 = vmatpush1.msra.mxu0 0.0
    %1048 = vmatprep.subr.mxu0 0.0
    %1049 = vmatpush1.msra.mxu0 0.0
    %1050 = vmatprep.subr.mxu0 0.0
    %1051 = vmatpush1.msra.mxu0 0.0
    %1052 = vmatprep.subr.mxu0 0.0
    %1053 = vmatpush1.msra.mxu0 0.0
    %1054 = vmatprep.subr.mxu0 0.0
    %1055 = vmatpush1.msra.mxu0 0.0
    %1056 = vmatprep.subr.mxu0 0.0
    %1057 = vmatpush1.msra.mxu0 0.0
    %1058 = vmatprep.subr.mxu0 0.0
    %1059 = vmatpush1.msra.mxu0 0.0
    %1060 = vmatprep.subr.mxu0 0.0
    %1061 = vmatpush1.msra.mxu0 0.0
    %1062 = vmatprep.subr.mxu0 0.0
    %1063 = vmatpush1.msra.mxu0 0.0
    %1064 = vmatprep.subr.mxu0 0.0
    %1065 = vmatpush1.msra.mxu0 0.0
    %1066 = vmatprep.subr.mxu0 0.0
    %1067 = vmatpush1.msra.mxu0 0.0
    %1068 = vmatprep.subr.mxu0 0.0
    %1069 = vmatpush1.msra.mxu0 0.0
    %1070 = vmatprep.subr.mxu0 0.0
    %1071 = vmatpush1.msra.mxu0 0.0
    %1072 = vmatprep.subr.mxu0 0.0
    %1073 = vmatpush1.msra.mxu0 0.0
    %1074 = vmatprep.subr.mxu0 0.0
    %1075 = vmatpush1.msra.mxu0 0.0
    %1076 = vmatprep.subr.mxu0 0.0
    %1077 = vmatpush1.msra.mxu0 0.0
    %1078 = vmatprep.subr.mxu0 0.0
    %1079 = vmatpush1.msra.mxu0 0.0
    %1080 = vmatprep.subr.mxu0 0.0
    %1081 = vmatpush1.msra.mxu0 0.0
    %1082 = vmatprep.subr.mxu0 0.0
    %1083 = vmatpush1.msra.mxu0 0.0
    %1084 = vmatprep.subr.mxu0 0.0
    %1085 = vmatpush1.msra.mxu0 0.0
    %1086 = vmatprep.subr.mxu0 0.0
    %1087 = vmatpush1.msra.mxu0 0.0
    %1088 = vmatprep.subr.mxu0 0.0
    %1089 = vmatpush1.msra.mxu0 0.0
    %1090 = vmatprep.subr.mxu0 0.0
    %1091 = vmatpush1.msra.mxu0 0.0
    %1092 = vmatprep.subr.mxu0 0.0
    %1093 = vmatpush1.msra.mxu0 0.0
    %1094 = vmatprep.subr.mxu0 0.0
    %1095 = vmatpush1.msra.mxu0 0.0
    %1096 = vmatprep.mubr.f32.mxu0 0.0
    %v1097 = vand.u32 %v931, 4294901760
    %1098 = vmatmul.mubr.f32.gmra.mrb[0].mxu0 %v1097
    %v1099 = vpop.f32.mrb[0].mxu0
    %v1100 = vadd.f32 %v1009, %v1099
    %v1101 = vpop.f32.mrb[0].mxu0
    %1102 = vdwg.mxu0
    %1103 = vmatprep.subr.mxu0 0.0
    %v1104 = vand.u32 %v925, 4294901760
    %v1105 = vsub.f32 %v925, %v1104
    %1106 = vmatpush1.msra.mxu0 %v1105
    %1107 = vmatprep.subr.mxu0 0.0
    %v1108 = vand.u32 %v926, 4294901760
    %v1109 = vsub.f32 %v926, %v1108
    %1110 = vmatpush1.msra.mxu0 %v1109
    %1111 = vmatprep.subr.mxu0 0.0
    %v1112 = vand.u32 %v927, 4294901760
    %v1113 = vsub.f32 %v927, %v1112
    %1114 = vmatpush1.msra.mxu0 %v1113
    %1115 = vmatprep.subr.mxu0 0.0
    %v1116 = vand.u32 %v928, 4294901760
    %v1117 = vsub.f32 %v928, %v1116
    %1118 = vmatpush1.msra.mxu0 %v1117
    %1119 = vmatprep.subr.mxu0 0.0
    %1120 = vmatpush1.msra.mxu0 0.0
    %1121 = vmatprep.subr.mxu0 0.0
    %1122 = vmatpush1.msra.mxu0 0.0
    %1123 = vmatprep.subr.mxu0 0.0
    %1124 = vmatpush1.msra.mxu0 0.0
    %1125 = vmatprep.subr.mxu0 0.0
    %1126 = vmatpush1.msra.mxu0 0.0
    %1127 = vmatprep.subr.mxu0 0.0
    %1128 = vmatpush1.msra.mxu0 0.0
    %1129 = vmatprep.subr.mxu0 0.0
    %1130 = vmatpush1.msra.mxu0 0.0
    %1131 = vmatprep.subr.mxu0 0.0
    %1132 = vmatpush1.msra.mxu0 0.0
    %1133 = vmatprep.subr.mxu0 0.0
    %1134 = vmatpush1.msra.mxu0 0.0
    %1135 = vmatprep.subr.mxu0 0.0
    %1136 = vmatpush1.msra.mxu0 0.0
    %1137 = vmatprep.subr.mxu0 0.0
    %1138 = vmatpush1.msra.mxu0 0.0
    %1139 = vmatprep.subr.mxu0 0.0
    %1140 = vmatpush1.msra.mxu0 0.0
    %1141 = vmatprep.subr.mxu0 0.0
    %1142 = vmatpush1.msra.mxu0 0.0
    %1143 = vmatprep.subr.mxu0 0.0
    %1144 = vmatpush1.msra.mxu0 0.0
    %1145 = vmatprep.subr.mxu0 0.0
    %1146 = vmatpush1.msra.mxu0 0.0
    %1147 = vmatprep.subr.mxu0 0.0
    %1148 = vmatpush1.msra.mxu0 0.0
    %1149 = vmatprep.subr.mxu0 0.0
    %1150 = vmatpush1.msra.mxu0 0.0
    %1151 = vmatprep.subr.mxu0 0.0
    %1152 = vmatpush1.msra.mxu0 0.0
    %1153 = vmatprep.subr.mxu0 0.0
    %1154 = vmatpush1.msra.mxu0 0.0
    %1155 = vmatprep.subr.mxu0 0.0
    %1156 = vmatpush1.msra.mxu0 0.0
    %1157 = vmatprep.subr.mxu0 0.0
    %1158 = vmatpush1.msra.mxu0 0.0
    %1159 = vmatprep.subr.mxu0 0.0
    %1160 = vmatpush1.msra.mxu0 0.0
    %1161 = vmatprep.subr.mxu0 0.0
    %1162 = vmatpush1.msra.mxu0 0.0
    %1163 = vmatprep.subr.mxu0 0.0
    %1164 = vmatpush1.msra.mxu0 0.0
    %1165 = vmatprep.subr.mxu0 0.0
    %1166 = vmatpush1.msra.mxu0 0.0
    %1167 = vmatprep.subr.mxu0 0.0
    %1168 = vmatpush1.msra.mxu0 0.0
    %1169 = vmatprep.subr.mxu0 0.0
    %1170 = vmatpush1.msra.mxu0 0.0
    %1171 = vmatprep.subr.mxu0 0.0
    %1172 = vmatpush1.msra.mxu0 0.0
    %1173 = vmatprep.subr.mxu0 0.0
    %1174 = vmatpush1.msra.mxu0 0.0
    %1175 = vmatprep.mubr.f32.mxu0 0.0
    %v1176 = vand.u32 %v931, 4294901760
    %v1177 = vsub.f32 %v931, %v1176
    %1178 = vmatmul.mubr.f32.gmra.mrb[0].mxu0 %v1177
    %v1179 = vpop.f32.mrb[0].mxu0
    %v1180 = vadd.f32 %v1100, %v1179
    %v1181 = vpop.f32.mrb[0].mxu0
    %1182 = vdwg.mxu0
    %1183 = vmatprep.subr.mxu0 0.0
    %v1184 = vand.u32 %v925, 4294901760
    %1185 = vmatpush1.msra.mxu0 %v1184
    %1186 = vmatprep.subr.mxu0 0.0
    %v1187 = vand.u32 %v926, 4294901760
    %1188 = vmatpush1.msra.mxu0 %v1187
    %1189 = vmatprep.subr.mxu0 0.0
    %v1190 = vand.u32 %v927, 4294901760
    %1191 = vmatpush1.msra.mxu0 %v1190
    %1192 = vmatprep.subr.mxu0 0.0
    %v1193 = vand.u32 %v928, 4294901760
    %1194 = vmatpush1.msra.mxu0 %v1193
    %1195 = vmatprep.subr.mxu0 0.0
    %1196 = vmatpush1.msra.mxu0 0.0
    %1197 = vmatprep.subr.mxu0 0.0
    %1198 = vmatpush1.msra.mxu0 0.0
    %1199 = vmatprep.subr.mxu0 0.0
    %1200 = vmatpush1.msra.mxu0 0.0
    %1201 = vmatprep.subr.mxu0 0.0
    %1202 = vmatpush1.msra.mxu0 0.0
    %1203 = vmatprep.subr.mxu0 0.0
    %1204 = vmatpush1.msra.mxu0 0.0
    %1205 = vmatprep.subr.mxu0 0.0
    %1206 = vmatpush1.msra.mxu0 0.0
    %1207 = vmatprep.subr.mxu0 0.0
    %1208 = vmatpush1.msra.mxu0 0.0
    %1209 = vmatprep.subr.mxu0 0.0
    %1210 = vmatpush1.msra.mxu0 0.0
    %1211 = vmatprep.subr.mxu0 0.0
    %1212 = vmatpush1.msra.mxu0 0.0
    %1213 = vmatprep.subr.mxu0 0.0
    %1214 = vmatpush1.msra.mxu0 0.0
    %1215 = vmatprep.subr.mxu0 0.0
    %1216 = vmatpush1.msra.mxu0 0.0
    %1217 = vmatprep.subr.mxu0 0.0
    %1218 = vmatpush1.msra.mxu0 0.0
    %1219 = vmatprep.subr.mxu0 0.0
    %1220 = vmatpush1.msra.mxu0 0.0
    %1221 = vmatprep.subr.mxu0 0.0
    %1222 = vmatpush1.msra.mxu0 0.0
    %1223 = vmatprep.subr.mxu0 0.0
    %1224 = vmatpush1.msra.mxu0 0.0
    %1225 = vmatprep.subr.mxu0 0.0
    %1226 = vmatpush1.msra.mxu0 0.0
    %1227 = vmatprep.subr.mxu0 0.0
    %1228 = vmatpush1.msra.mxu0 0.0
    %1229 = vmatprep.subr.mxu0 0.0
    %1230 = vmatpush1.msra.mxu0 0.0
    %1231 = vmatprep.subr.mxu0 0.0
    %1232 = vmatpush1.msra.mxu0 0.0
    %1233 = vmatprep.subr.mxu0 0.0
    %1234 = vmatpush1.msra.mxu0 0.0
    %1235 = vmatprep.subr.mxu0 0.0
    %1236 = vmatpush1.msra.mxu0 0.0
    %1237 = vmatprep.subr.mxu0 0.0
    %1238 = vmatpush1.msra.mxu0 0.0
    %1239 = vmatprep.subr.mxu0 0.0
    %1240 = vmatpush1.msra.mxu0 0.0
    %1241 = vmatprep.subr.mxu0 0.0
    %1242 = vmatpush1.msra.mxu0 0.0
    %1243 = vmatprep.subr.mxu0 0.0
    %1244 = vmatpush1.msra.mxu0 0.0
    %1245 = vmatprep.subr.mxu0 0.0
    %1246 = vmatpush1.msra.mxu0 0.0
    %1247 = vmatprep.subr.mxu0 0.0
    %1248 = vmatpush1.msra.mxu0 0.0
    %1249 = vmatprep.subr.mxu0 0.0
    %1250 = vmatpush1.msra.mxu0 0.0
    %1251 = vmatprep.mubr.f32.mxu0 0.0
    %v1252 = vand.u32 %v931, 4294901760
    %v1253 = vsub.f32 %v931, %v1252
    %v1254 = vand.u32 %v1253, 4294901760
    %1255 = vmatmul.mubr.f32.gmra.mrb[0].mxu0 %v1254
    %v1256 = vpop.f32.mrb[0].mxu0
    %v1257 = vadd.f32 %v1180, %v1256
    %v1258 = vpop.f32.mrb[0].mxu0
    %1259 = vdwg.mxu0
    %1260 = vmatprep.subr.mxu0 0.0
    %v1261 = vand.u32 %v925, 4294901760
    %v1262 = vsub.f32 %v925, %v1261
    %v1263 = vand.u32 %v1262, 4294901760
    %1264 = vmatpush1.msra.mxu0 %v1263
    %1265 = vmatprep.subr.mxu0 0.0
    %v1266 = vand.u32 %v926, 4294901760
    %v1267 = vsub.f32 %v926, %v1266
    %v1268 = vand.u32 %v1267, 4294901760
    %1269 = vmatpush1.msra.mxu0 %v1268
    %1270 = vmatprep.subr.mxu0 0.0
    %v1271 = vand.u32 %v927, 4294901760
    %v1272 = vsub.f32 %v927, %v1271
    %v1273 = vand.u32 %v1272, 4294901760
    %1274 = vmatpush1.msra.mxu0 %v1273
    %1275 = vmatprep.subr.mxu0 0.0
    %v1276 = vand.u32 %v928, 4294901760
    %v1277 = vsub.f32 %v928, %v1276
    %v1278 = vand.u32 %v1277, 4294901760
    %1279 = vmatpush1.msra.mxu0 %v1278
    %1280 = vmatprep.subr.mxu0 0.0
    %1281 = vmatpush1.msra.mxu0 0.0
    %1282 = vmatprep.subr.mxu0 0.0
    %1283 = vmatpush1.msra.mxu0 0.0
    %1284 = vmatprep.subr.mxu0 0.0
    %1285 = vmatpush1.msra.mxu0 0.0
    %1286 = vmatprep.subr.mxu0 0.0
    %1287 = vmatpush1.msra.mxu0 0.0
    %1288 = vmatprep.subr.mxu0 0.0
    %1289 = vmatpush1.msra.mxu0 0.0
    %1290 = vmatprep.subr.mxu0 0.0
    %1291 = vmatpush1.msra.mxu0 0.0
    %1292 = vmatprep.subr.mxu0 0.0
    %1293 = vmatpush1.msra.mxu0 0.0
    %1294 = vmatprep.subr.mxu0 0.0
    %1295 = vmatpush1.msra.mxu0 0.0
    %1296 = vmatprep.subr.mxu0 0.0
    %1297 = vmatpush1.msra.mxu0 0.0
    %1298 = vmatprep.subr.mxu0 0.0
    %1299 = vmatpush1.msra.mxu0 0.0
    %1300 = vmatprep.subr.mxu0 0.0
    %1301 = vmatpush1.msra.mxu0 0.0
    %1302 = vmatprep.subr.mxu0 0.0
    %1303 = vmatpush1.msra.mxu0 0.0
    %1304 = vmatprep.subr.mxu0 0.0
    %1305 = vmatpush1.msra.mxu0 0.0
    %1306 = vmatprep.subr.mxu0 0.0
    %1307 = vmatpush1.msra.mxu0 0.0
    %1308 = vmatprep.subr.mxu0 0.0
    %1309 = vmatpush1.msra.mxu0 0.0
    %1310 = vmatprep.subr.mxu0 0.0
    %1311 = vmatpush1.msra.mxu0 0.0
    %1312 = vmatprep.subr.mxu0 0.0
    %1313 = vmatpush1.msra.mxu0 0.0
    %1314 = vmatprep.subr.mxu0 0.0
    %1315 = vmatpush1.msra.mxu0 0.0
    %1316 = vmatprep.subr.mxu0 0.0
    %1317 = vmatpush1.msra.mxu0 0.0
    %1318 = vmatprep.subr.mxu0 0.0
    %1319 = vmatpush1.msra.mxu0 0.0
    %1320 = vmatprep.subr.mxu0 0.0
    %1321 = vmatpush1.msra.mxu0 0.0
    %1322 = vmatprep.subr.mxu0 0.0
    %1323 = vmatpush1.msra.mxu0 0.0
    %1324 = vmatprep.subr.mxu0 0.0
    %1325 = vmatpush1.msra.mxu0 0.0
    %1326 = vmatprep.subr.mxu0 0.0
    %1327 = vmatpush1.msra.mxu0 0.0
    %1328 = vmatprep.subr.mxu0 0.0
    %1329 = vmatpush1.msra.mxu0 0.0
    %1330 = vmatprep.subr.mxu0 0.0
    %1331 = vmatpush1.msra.mxu0 0.0
    %1332 = vmatprep.subr.mxu0 0.0
    %1333 = vmatpush1.msra.mxu0 0.0
    %1334 = vmatprep.subr.mxu0 0.0
    %1335 = vmatpush1.msra.mxu0 0.0
    %1336 = vmatprep.mubr.f32.mxu0 0.0
    %v1337 = vand.u32 %v931, 4294901760
    %1338 = vmatmul.mubr.f32.gmra.mrb[0].mxu0 %v1337
    %v1339 = vpop.f32.mrb[0].mxu0
    %v1340 = vadd.f32 %v1257, %v1339
    %v1341 = vpop.f32.mrb[0].mxu0
    %1342 = vdwg.mxu0
    %1343 = vmatprep.subr.mxu0 0.0
    %v1344 = vand.u32 %v925, 4294901760
    %1345 = vmatpush1.msra.mxu0 %v1344
    %1346 = vmatprep.subr.mxu0 0.0
    %v1347 = vand.u32 %v926, 4294901760
    %1348 = vmatpush1.msra.mxu0 %v1347
    %1349 = vmatprep.subr.mxu0 0.0
    %v1350 = vand.u32 %v927, 4294901760
    %1351 = vmatpush1.msra.mxu0 %v1350
    %1352 = vmatprep.subr.mxu0 0.0
    %v1353 = vand.u32 %v928, 4294901760
    %1354 = vmatpush1.msra.mxu0 %v1353
    %1355 = vmatprep.subr.mxu0 0.0
    %1356 = vmatpush1.msra.mxu0 0.0
    %1357 = vmatprep.subr.mxu0 0.0
    %1358 = vmatpush1.msra.mxu0 0.0
    %1359 = vmatprep.subr.mxu0 0.0
    %1360 = vmatpush1.msra.mxu0 0.0
    %1361 = vmatprep.subr.mxu0 0.0
    %1362 = vmatpush1.msra.mxu0 0.0
    %1363 = vmatprep.subr.mxu0 0.0
    %1364 = vmatpush1.msra.mxu0 0.0
    %1365 = vmatprep.subr.mxu0 0.0
    %1366 = vmatpush1.msra.mxu0 0.0
    %1367 = vmatprep.subr.mxu0 0.0
    %1368 = vmatpush1.msra.mxu0 0.0
    %1369 = vmatprep.subr.mxu0 0.0
    %1370 = vmatpush1.msra.mxu0 0.0
    %1371 = vmatprep.subr.mxu0 0.0
    %1372 = vmatpush1.msra.mxu0 0.0
    %1373 = vmatprep.subr.mxu0 0.0
    %1374 = vmatpush1.msra.mxu0 0.0
    %1375 = vmatprep.subr.mxu0 0.0
    %1376 = vmatpush1.msra.mxu0 0.0
    %1377 = vmatprep.subr.mxu0 0.0
    %1378 = vmatpush1.msra.mxu0 0.0
    %1379 = vmatprep.subr.mxu0 0.0
    %1380 = vmatpush1.msra.mxu0 0.0
    %1381 = vmatprep.subr.mxu0 0.0
    %1382 = vmatpush1.msra.mxu0 0.0
    %1383 = vmatprep.subr.mxu0 0.0
    %1384 = vmatpush1.msra.mxu0 0.0
    %1385 = vmatprep.subr.mxu0 0.0
    %1386 = vmatpush1.msra.mxu0 0.0
    %1387 = vmatprep.subr.mxu0 0.0
    %1388 = vmatpush1.msra.mxu0 0.0
    %1389 = vmatprep.subr.mxu0 0.0
    %1390 = vmatpush1.msra.mxu0 0.0
    %1391 = vmatprep.subr.mxu0 0.0
    %1392 = vmatpush1.msra.mxu0 0.0
    %1393 = vmatprep.subr.mxu0 0.0
    %1394 = vmatpush1.msra.mxu0 0.0
    %1395 = vmatprep.subr.mxu0 0.0
    %1396 = vmatpush1.msra.mxu0 0.0
    %1397 = vmatprep.subr.mxu0 0.0
    %1398 = vmatpush1.msra.mxu0 0.0
    %1399 = vmatprep.subr.mxu0 0.0
    %1400 = vmatpush1.msra.mxu0 0.0
    %1401 = vmatprep.subr.mxu0 0.0
    %1402 = vmatpush1.msra.mxu0 0.0
    %1403 = vmatprep.subr.mxu0 0.0
    %1404 = vmatpush1.msra.mxu0 0.0
    %1405 = vmatprep.subr.mxu0 0.0
    %1406 = vmatpush1.msra.mxu0 0.0
    %1407 = vmatprep.subr.mxu0 0.0
    %1408 = vmatpush1.msra.mxu0 0.0
    %1409 = vmatprep.subr.mxu0 0.0
    %1410 = vmatpush1.msra.mxu0 0.0
    %1411 = vmatprep.mubr.f32.mxu0 0.0
    %v1412 = vand.u32 %v931, 4294901760
    %1413 = vmatmul.mubr.f32.gmra.mrb[0].mxu0 %v1412
    %v1414 = vpop.f32.mrb[0].mxu0
    %v1415 = vadd.f32 %v1340, %v1414
    %v1416 = vpop.f32.mrb[0].mxu0
    %1417 = vdwg.mxu0
    %1418 = vst [vmem:[#allocation2] sm:$0xf] %v1415
    // Predicated region
    $region18: #{tpu_custom_call.1} parent=1 // pred_check
      _
    $region19: #{tpu_custom_call.1} parent=1 // pred_check_branch
      %1420 = sbr.rel (0) target = $region21
    $region20: #{tpu_custom_call.1} parent=1 // pred_region
      %s1422 = ssub.s32 64, 64
      %1423 = vsyncadd [#allocation3], %s1422
      %s1425 = sshll.u32 [#allocation2], 4
      %s1426 = int_to_ptr.vmem [resolvable:$true] %s1425
      %1428 = dma.vmem_to_hbm [thread:$0]  %s1426, 64, %s4, [#allocation3]
    $region21: #{tpu_custom_call.1} parent=1 // pred_fallthru
      _
    // Predicated region
    $region22: #{tpu_custom_call.1} parent=1 // pred_check
      _
    $region23: #{tpu_custom_call.1} parent=1 // pred_check_branch
      %1430 = sbr.rel (0) target = $region25
    $region24: #{tpu_custom_call.1} parent=1 // pred_region
      %1431 = dma.done [#allocation3], 64
    $region25: #{tpu_custom_call.1} parent=1 // pred_fallthru
      _
    %1432 = vsyncpa [#allocation3], 1

</llo_original>
